<compile_context>
chip_gen: v7x
topology: tpu7x:2x2x1
jax: 0.10.0
libtpu: 0.0.40
codegen_flags: <defaults>
</compile_context>

<pallas_src>
import functools
import math

import jax
import jax.numpy as jnp
from jax.experimental import pallas as pl
from jax.experimental.pallas import tpu as pltpu


# ---------------------------------------------------------------------------
# Fused MHA kernel body (one batch element, one q-tile, all heads)
# ---------------------------------------------------------------------------
def _mha_body(q_ref, k_ref, v_ref, w_ref, b_ref, o_ref, p_ref, *,
              n_head, d_k, scale):
    bf16 = jnp.bfloat16
    f32 = jnp.float32

    # Q/K/V projections: bf16 MXU operands, f32 accumulation, f32 bias add.
    # q_ref: (tq, dm), k_ref/v_ref: (lk, dm), w_ref: (3, dm, dm) bf16 (d_in, d_out)
    qp = jnp.dot(q_ref[...].astype(bf16), w_ref[0],
                 preferred_element_type=f32) + b_ref[0]
    kp = jnp.dot(k_ref[...].astype(bf16), w_ref[1],
                 preferred_element_type=f32) + b_ref[1]
    vp = jnp.dot(v_ref[...].astype(bf16), w_ref[2],
                 preferred_element_type=f32) + b_ref[2]

    # Single bf16 cast of the projected activations for the attention matmuls.
    qpb = qp.astype(bf16)
    kpb = kp.astype(bf16)
    vpb = vp.astype(bf16)

    for h in range(n_head):                      # static unroll over heads
        lo, hi = h * d_k, (h + 1) * d_k
        q_h = qpb[:, lo:hi]                      # (tq, d_k)
        k_h = kpb[:, lo:hi]                      # (lk, d_k)
        v_h = vpb[:, lo:hi]                      # (lk, d_k)

        s = jnp.einsum("qd,kd->qk", q_h, k_h,
                       preferred_element_type=f32) * scale      # (tq, lk) f32
        m = jnp.max(s, axis=-1, keepdims=True)                  # stable softmax
        e = jnp.exp(s - m)
        p = e * pl.reciprocal(jnp.sum(e, axis=-1, keepdims=True), approx=True)

        o_h = jnp.dot(p.astype(bf16), v_h, preferred_element_type=f32)
        o_ref[:, lo:hi] = o_h.astype(o_ref.dtype)               # head-major concat
        if p_ref is not None:
            p_ref[h, :, :] = p.astype(p_ref.dtype)


def _fused_mha_probs_kernel(q_ref, k_ref, v_ref, w_ref, b_ref,
                            o_ref, p_ref, **kw):
    _mha_body(q_ref, k_ref, v_ref, w_ref, b_ref, o_ref, p_ref, **kw)


def _fused_mha_kernel(q_ref, k_ref, v_ref, w_ref, b_ref, o_ref, **kw):
    _mha_body(q_ref, k_ref, v_ref, w_ref, b_ref, o_ref, None, **kw)


def _pick_q_tile(lq):
    if lq <= 256:
        return lq
    for t in (256, 128, 64, 32, 16, 8):          # multiples of 8 (sublane rule)
        if lq % t == 0:
            return t
    return lq                                    # full-extent fallback


# ---------------------------------------------------------------------------
# pallas_call builder
# ---------------------------------------------------------------------------
def fused_mha_pallas(q, k, v, w_qkv, b_qkv, n_head, *, return_probs=True):
    b, lq, dm = q.shape
    lk = k.shape[1]
    lv = v.shape[1]
    d_k = dm // n_head
    scale = 1.0 / math.sqrt(d_k)
    tq = _pick_q_tile(lq)

    in_specs = [
        pl.BlockSpec((None, tq, dm), lambda bi, qi: (bi, qi, 0)),   # q tile
        pl.BlockSpec((None, lk, dm), lambda bi, qi: (bi, 0, 0)),    # full K
        pl.BlockSpec((None, lv, dm), lambda bi, qi: (bi, 0, 0)),    # full V
        pl.BlockSpec((3, dm, dm),    lambda bi, qi: (0, 0, 0)),     # resident W
        pl.BlockSpec((3, 1, dm),     lambda bi, qi: (0, 0, 0)),     # resident b
    ]
    out_o_spec = pl.BlockSpec((None, tq, dm), lambda bi, qi: (bi, qi, 0))
    out_o_shape = jax.ShapeDtypeStruct((b, lq, dm), jnp.float32)

    kw = dict(n_head=n_head, d_k=d_k, scale=scale)
    if return_probs:
        kernel = functools.partial(_fused_mha_probs_kernel, **kw)
        out_shape = (out_o_shape,
                     jax.ShapeDtypeStruct((n_head, b, lq, lk), jnp.float32))
        out_specs = (out_o_spec,
                     pl.BlockSpec((n_head, None, tq, lk),
                                  lambda bi, qi: (0, bi, qi, 0)))
    else:
        kernel = functools.partial(_fused_mha_kernel, **kw)
        out_shape = out_o_shape
        out_specs = out_o_spec

    return pl.pallas_call(
        kernel,
        out_shape=out_shape,
        grid_spec=pltpu.PrefetchScalarGridSpec(
            num_scalar_prefetch=0,
            grid=(b, lq // tq),
            in_specs=in_specs,
            out_specs=out_specs,
        ),
        compiler_params=pltpu.CompilerParams(
            dimension_semantics=("parallel", "parallel"),
            vmem_limit_bytes=64 * 1024 * 1024,
        ),
    )(q, k, v, w_qkv, b_qkv)


# ---------------------------------------------------------------------------
# Forward wrapper matching MultiHeadAttention.forward semantics
# ---------------------------------------------------------------------------
def prepare_mha_params(params):
    """One-time prep: transpose PyTorch (out,in) weights to (in,out), cast to
    bf16, and stack Q/K/V weights/biases into single slabs."""
    wq, bq, wk, bk, wv, bv = params
    dm = wq.shape[0]
    w_qkv = jnp.stack([wq.T, wk.T, wv.T]).astype(jnp.bfloat16)      # (3, dm, dm)
    b_qkv = jnp.stack([bq, bk, bv]).reshape(3, 1, dm).astype(jnp.float32)
    return w_qkv, b_qkv


@functools.partial(jax.jit, static_argnames=("n_head", "return_probs"))
def multi_head_attention_forward(q, k, v, w_qkv, b_qkv, n_head,
                                 attention_mask=None, return_probs=True):
    # attention_mask is computed-but-never-applied in the reference forward.
    del attention_mask
    if return_probs:
        out, probs = fused_mha_pallas(q, k, v, w_qkv, b_qkv, n_head,
                                      return_probs=True)
        return out, probs
    out = fused_mha_pallas(q, k, v, w_qkv, b_qkv, n_head, return_probs=False)
    return out, None


# ---------------------------------------------------------------------------
# Pure-JAX f32 reference mirroring the PyTorch math (for validation)
# ---------------------------------------------------------------------------
def mha_reference(q, k, v, params, n_head):
    wq, bq, wk, bk, wv, bv = params
    b, lq, dm = q.shape
    lk = k.shape[1]
    lv = v.shape[1]
    d_k = dm // n_head

    qp = q @ wq.T + bq
    kp = k @ wk.T + bk
    vp = v @ wv.T + bv

    def split(x, length):
        return jnp.transpose(x.reshape(b, length, n_head, d_k),
                             (2, 0, 1, 3)).reshape(n_head * b, length, d_k)

    qh, kh, vh = split(qp, lq), split(kp, lk), split(vp, lv)
    scores = jnp.einsum("bqd,bkd->bqk", qh, kh) / math.sqrt(d_k)
    probs = jax.nn.softmax(scores, axis=-1)
    out = jnp.einsum("bqk,bkd->bqd", probs, vh)
    out = jnp.transpose(out.reshape(n_head, b, lq, d_k),
                        (1, 2, 0, 3)).reshape(b, lq, dm)
    return out, probs.reshape(n_head, b, lq, lk)


def init_params(key, d_model):
    stdv = 1.0 / math.sqrt(d_model)
    ks = jax.random.split(key, 6)
    wq = jax.random.uniform(ks[0], (d_model, d_model), jnp.float32, -stdv, stdv)
    bq = jax.random.uniform(ks[1], (d_model,), jnp.float32, -stdv, stdv)
    wk = jax.random.uniform(ks[2], (d_model, d_model), jnp.float32, -stdv, stdv)
    bk = jax.random.uniform(ks[3], (d_model,), jnp.float32, -stdv, stdv)
    wv = jax.random.uniform(ks[4], (d_model, d_model), jnp.float32, -stdv, stdv)
    bv = jax.random.uniform(ks[5], (d_model,), jnp.float32, -stdv, stdv)
    return (wq, bq, wk, bk, wv, bv)


if __name__ == "__main__":
    B, L, D_MODEL, N_HEAD = 2, 8, 64, 4

    key = jax.random.PRNGKey(0)
    kparam, kq, kk, kv = jax.random.split(key, 4)
    params = init_params(kparam, D_MODEL)
    w_qkv, b_qkv = prepare_mha_params(params)      # one-time transpose + bf16 cast

    q = jax.random.normal(kq, (B, L, D_MODEL), jnp.float32)
    k = jax.random.normal(kk, (B, L, D_MODEL), jnp.float32)
    v = jax.random.normal(kv, (B, L, D_MODEL), jnp.float32)

    out, probs = multi_head_attention_forward(q, k, v, w_qkv, b_qkv,
                                              n_head=N_HEAD)
    out = jax.block_until_ready(out)
    probs = jax.block_until_ready(probs)

    ref_out, ref_probs = mha_reference(q, k, v, params, N_HEAD)
    assert out.shape == (B, L, D_MODEL)
    assert probs.shape == (N_HEAD, B, L, L)
    # bf16 MXU operands (f32 accumulation / softmax) loosen the f32 check.
    assert jnp.allclose(out, ref_out, atol=3e-2, rtol=3e-2)
    assert jnp.allclose(probs, ref_probs, atol=3e-2, rtol=3e-2)

    print("KERNEL_OK")
</pallas_src>

<mosaic_0001>
module attributes {stable_mosaic.version = 11 : i64} {
  func.func @_fused_mha_probs_kernel(%arg0: i32, %arg1: i32, %arg2: memref<1x8x64xf32, #tpu.memory_space<vmem>>, %arg3: memref<1x8x64xf32, #tpu.memory_space<vmem>>, %arg4: memref<1x8x64xf32, #tpu.memory_space<vmem>>, %arg5: memref<3x64x64xbf16, #tpu.memory_space<vmem>>, %arg6: memref<3x1x64xf32, #tpu.memory_space<vmem>>, %arg7: memref<1x8x64xf32, #tpu.memory_space<vmem>>, %arg8: memref<4x1x8x8xf32, #tpu.memory_space<vmem>>) attributes {dimension_semantics = [#tpu.dimension_semantics<parallel>, #tpu.dimension_semantics<parallel>], iteration_bounds = array<i64: 2, 1>, scalar_prefetch = 0 : i64, scratch_operands = 0 : i64, tpu.core_type = #tpu.core_type<tc>, window_params = [{transform_indices = @transform_0, window_bounds = array<i64: 1, 8, 64>}, {transform_indices = @transform_1, window_bounds = array<i64: 1, 8, 64>}, {transform_indices = @transform_2, window_bounds = array<i64: 1, 8, 64>}, {pipeline_mode = #tpu.pipeline_mode<synchronous>, transform_indices = @transform_3, window_bounds = array<i64: 3, 64, 64>}, {pipeline_mode = #tpu.pipeline_mode<synchronous>, transform_indices = @transform_4, window_bounds = array<i64: 3, 1, 64>}, {transform_indices = @transform_5, window_bounds = array<i64: 1, 8, 64>}, {transform_indices = @transform_6, window_bounds = array<i64: 4, 1, 8, 8>}]} {
    %c0 = arith.constant 0 : index
    %c0_0 = arith.constant 0 : index
    %c0_1 = arith.constant 0 : index
    %0 = vector.load %arg2[%c0, %c0_0, %c0_1] : memref<1x8x64xf32, #tpu.memory_space<vmem>>, vector<1x8x64xf32>
    %1 = vector.shape_cast %0 : vector<1x8x64xf32> to vector<8x64xf32>
    %2 = arith.truncf %1 : vector<8x64xf32> to vector<8x64xbf16>
    %c0_2 = arith.constant 0 : index
    %c0_3 = arith.constant 0 : index
    %c0_4 = arith.constant 0 : index
    %3 = vector.load %arg5[%c0_2, %c0_3, %c0_4] : memref<3x64x64xbf16, #tpu.memory_space<vmem>>, vector<1x64x64xbf16>
    %4 = vector.shape_cast %3 : vector<1x64x64xbf16> to vector<64x64xbf16>
    %cst = arith.constant dense<0.000000e+00> : vector<8x64xf32>
    %5 = tpu.matmul %2, %4, %cst {dimension_numbers = #tpu.dot_dimension_numbers<[1], [0], [0], [1], [0, 0, 1, 1], [], []>} : vector<8x64xbf16>, vector<64x64xbf16>, vector<8x64xf32> -> vector<8x64xf32>
    %c0_5 = arith.constant 0 : index
    %c0_6 = arith.constant 0 : index
    %c0_7 = arith.constant 0 : index
    %6 = vector.load %arg6[%c0_5, %c0_6, %c0_7] : memref<3x1x64xf32, #tpu.memory_space<vmem>>, vector<1x1x64xf32>
    %7 = vector.shape_cast %6 : vector<1x1x64xf32> to vector<1x64xf32>
    %8 = vector.broadcast %7 : vector<1x64xf32> to vector<8x64xf32>
    %9 = arith.addf %5, %8 : vector<8x64xf32>
    %c0_8 = arith.constant 0 : index
    %c0_9 = arith.constant 0 : index
    %c0_10 = arith.constant 0 : index
    %10 = vector.load %arg3[%c0_8, %c0_9, %c0_10] : memref<1x8x64xf32, #tpu.memory_space<vmem>>, vector<1x8x64xf32>
    %11 = vector.shape_cast %10 : vector<1x8x64xf32> to vector<8x64xf32>
    %12 = arith.truncf %11 : vector<8x64xf32> to vector<8x64xbf16>
    %c1 = arith.constant 1 : index
    %c0_11 = arith.constant 0 : index
    %c0_12 = arith.constant 0 : index
    %13 = vector.load %arg5[%c1, %c0_11, %c0_12] : memref<3x64x64xbf16, #tpu.memory_space<vmem>>, vector<1x64x64xbf16>
    %14 = vector.shape_cast %13 : vector<1x64x64xbf16> to vector<64x64xbf16>
    %cst_13 = arith.constant dense<0.000000e+00> : vector<8x64xf32>
    %15 = tpu.matmul %12, %14, %cst_13 {dimension_numbers = #tpu.dot_dimension_numbers<[1], [0], [0], [1], [0, 0, 1, 1], [], []>} : vector<8x64xbf16>, vector<64x64xbf16>, vector<8x64xf32> -> vector<8x64xf32>
    %c1_14 = arith.constant 1 : index
    %c0_15 = arith.constant 0 : index
    %c0_16 = arith.constant 0 : index
    %16 = vector.load %arg6[%c1_14, %c0_15, %c0_16] : memref<3x1x64xf32, #tpu.memory_space<vmem>>, vector<1x1x64xf32>
    %17 = vector.shape_cast %16 : vector<1x1x64xf32> to vector<1x64xf32>
    %18 = vector.broadcast %17 : vector<1x64xf32> to vector<8x64xf32>
    %19 = arith.addf %15, %18 : vector<8x64xf32>
    %c0_17 = arith.constant 0 : index
    %c0_18 = arith.constant 0 : index
    %c0_19 = arith.constant 0 : index
    %20 = vector.load %arg4[%c0_17, %c0_18, %c0_19] : memref<1x8x64xf32, #tpu.memory_space<vmem>>, vector<1x8x64xf32>
    %21 = vector.shape_cast %20 : vector<1x8x64xf32> to vector<8x64xf32>
    %22 = arith.truncf %21 : vector<8x64xf32> to vector<8x64xbf16>
    %c2 = arith.constant 2 : index
    %c0_20 = arith.constant 0 : index
    %c0_21 = arith.constant 0 : index
    %23 = vector.load %arg5[%c2, %c0_20, %c0_21] : memref<3x64x64xbf16, #tpu.memory_space<vmem>>, vector<1x64x64xbf16>
    %24 = vector.shape_cast %23 : vector<1x64x64xbf16> to vector<64x64xbf16>
    %cst_22 = arith.constant dense<0.000000e+00> : vector<8x64xf32>
    %25 = tpu.matmul %22, %24, %cst_22 {dimension_numbers = #tpu.dot_dimension_numbers<[1], [0], [0], [1], [0, 0, 1, 1], [], []>} : vector<8x64xbf16>, vector<64x64xbf16>, vector<8x64xf32> -> vector<8x64xf32>
    %c2_23 = arith.constant 2 : index
    %c0_24 = arith.constant 0 : index
    %c0_25 = arith.constant 0 : index
    %26 = vector.load %arg6[%c2_23, %c0_24, %c0_25] : memref<3x1x64xf32, #tpu.memory_space<vmem>>, vector<1x1x64xf32>
    %27 = vector.shape_cast %26 : vector<1x1x64xf32> to vector<1x64xf32>
    %28 = vector.broadcast %27 : vector<1x64xf32> to vector<8x64xf32>
    %29 = arith.addf %25, %28 : vector<8x64xf32>
    %30 = arith.truncf %9 : vector<8x64xf32> to vector<8x64xbf16>
    %31 = arith.truncf %19 : vector<8x64xf32> to vector<8x64xbf16>
    %32 = arith.truncf %29 : vector<8x64xf32> to vector<8x64xbf16>
    %33 = vector.extract_strided_slice %30 {offsets = [0, 0], sizes = [8, 16], strides = [1, 1]} : vector<8x64xbf16> to vector<8x16xbf16>
    %34 = vector.extract_strided_slice %31 {offsets = [0, 0], sizes = [8, 16], strides = [1, 1]} : vector<8x64xbf16> to vector<8x16xbf16>
    %35 = vector.extract_strided_slice %32 {offsets = [0, 0], sizes = [8, 16], strides = [1, 1]} : vector<8x64xbf16> to vector<8x16xbf16>
    "tpu.trace_start"() <{level = 10 : i32, message = "qd,kd->qk"}> : () -> ()
    %cst_26 = arith.constant dense<0.000000e+00> : vector<8x8xf32>
    %36 = tpu.matmul %33, %34, %cst_26 {dimension_numbers = #tpu.dot_dimension_numbers<[1], [1], [0], [0], [0, 0, 1, 0], [], []>} : vector<8x16xbf16>, vector<8x16xbf16>, vector<8x8xf32> -> vector<8x8xf32>
    "tpu.trace_stop"() : () -> ()
    %cst_27 = arith.constant 2.500000e-01 : f32
    %37 = vector.broadcast %cst_27 : f32 to vector<8x8xf32>
    %38 = arith.mulf %36, %37 : vector<8x8xf32>
    %cst_28 = arith.constant dense<0xFF800000> : vector<8xf32>
    %39 = vector.multi_reduction <maximumf>, %38, %cst_28 [1] : vector<8x8xf32> to vector<8xf32>
    %40 = vector.shape_cast %39 : vector<8xf32> to vector<8x1xf32>
    %41 = vector.broadcast %40 : vector<8x1xf32> to vector<8x8xf32>
    %42 = arith.subf %38, %41 : vector<8x8xf32>
    %43 = math.exp %42 : vector<8x8xf32>
    %cst_29 = arith.constant dense<0.000000e+00> : vector<8xf32>
    %44 = vector.multi_reduction <add>, %43, %cst_29 [1] : vector<8x8xf32> to vector<8xf32>
    %45 = vector.shape_cast %44 : vector<8xf32> to vector<8x1xf32>
    %46 = tpu.reciprocal %45 {approx = true} : vector<8x1xf32> -> vector<8x1xf32>
    %47 = vector.broadcast %46 : vector<8x1xf32> to vector<8x8xf32>
    %48 = arith.mulf %43, %47 : vector<8x8xf32>
    %49 = arith.truncf %48 : vector<8x8xf32> to vector<8x8xbf16>
    %cst_30 = arith.constant dense<0.000000e+00> : vector<8x16xf32>
    %50 = tpu.matmul %49, %35, %cst_30 {dimension_numbers = #tpu.dot_dimension_numbers<[1], [0], [0], [1], [0, 0, 1, 1], [], []>} : vector<8x8xbf16>, vector<8x16xbf16>, vector<8x16xf32> -> vector<8x16xf32>
    %c0_31 = arith.constant 0 : index
    %c0_32 = arith.constant 0 : index
    %c0_33 = arith.constant 0 : index
    %51 = vector.load %arg7[%c0_31, %c0_32, %c0_33] : memref<1x8x64xf32, #tpu.memory_space<vmem>>, vector<1x8x16xf32>
    %52 = vector.shape_cast %51 : vector<1x8x16xf32> to vector<8x16xf32>
    %53 = vector.shape_cast %50 : vector<8x16xf32> to vector<1x8x16xf32>
    tpu.vector_store %arg7[%c0_31, %c0_32, %c0_33], %53 {strides = array<i32>} : memref<1x8x64xf32, #tpu.memory_space<vmem>>, vector<1x8x16xf32>,
    %c0_34 = arith.constant 0 : index
    %c0_35 = arith.constant 0 : index
    %c0_36 = arith.constant 0 : index
    %c0_37 = arith.constant 0 : index
    %54 = vector.load %arg8[%c0_34, %c0_35, %c0_36, %c0_37] : memref<4x1x8x8xf32, #tpu.memory_space<vmem>>, vector<1x1x8x8xf32>
    %55 = vector.shape_cast %54 : vector<1x1x8x8xf32> to vector<8x8xf32>
    %56 = vector.shape_cast %48 : vector<8x8xf32> to vector<1x1x8x8xf32>
    tpu.vector_store %arg8[%c0_34, %c0_35, %c0_36, %c0_37], %56 {strides = array<i32>} : memref<4x1x8x8xf32, #tpu.memory_space<vmem>>, vector<1x1x8x8xf32>,
    %57 = vector.extract_strided_slice %30 {offsets = [0, 16], sizes = [8, 16], strides = [1, 1]} : vector<8x64xbf16> to vector<8x16xbf16>
    %58 = vector.extract_strided_slice %31 {offsets = [0, 16], sizes = [8, 16], strides = [1, 1]} : vector<8x64xbf16> to vector<8x16xbf16>
    %59 = vector.extract_strided_slice %32 {offsets = [0, 16], sizes = [8, 16], strides = [1, 1]} : vector<8x64xbf16> to vector<8x16xbf16>
    "tpu.trace_start"() <{level = 10 : i32, message = "qd,kd->qk"}> : () -> ()
    %cst_38 = arith.constant dense<0.000000e+00> : vector<8x8xf32>
    %60 = tpu.matmul %57, %58, %cst_38 {dimension_numbers = #tpu.dot_dimension_numbers<[1], [1], [0], [0], [0, 0, 1, 0], [], []>} : vector<8x16xbf16>, vector<8x16xbf16>, vector<8x8xf32> -> vector<8x8xf32>
    "tpu.trace_stop"() : () -> ()
    %cst_39 = arith.constant 2.500000e-01 : f32
    %61 = vector.broadcast %cst_39 : f32 to vector<8x8xf32>
    %62 = arith.mulf %60, %61 : vector<8x8xf32>
    %cst_40 = arith.constant dense<0xFF800000> : vector<8xf32>
    %63 = vector.multi_reduction <maximumf>, %62, %cst_40 [1] : vector<8x8xf32> to vector<8xf32>
    %64 = vector.shape_cast %63 : vector<8xf32> to vector<8x1xf32>
    %65 = vector.broadcast %64 : vector<8x1xf32> to vector<8x8xf32>
    %66 = arith.subf %62, %65 : vector<8x8xf32>
    %67 = math.exp %66 : vector<8x8xf32>
    %cst_41 = arith.constant dense<0.000000e+00> : vector<8xf32>
    %68 = vector.multi_reduction <add>, %67, %cst_41 [1] : vector<8x8xf32> to vector<8xf32>
    %69 = vector.shape_cast %68 : vector<8xf32> to vector<8x1xf32>
    %70 = tpu.reciprocal %69 {approx = true} : vector<8x1xf32> -> vector<8x1xf32>
    %71 = vector.broadcast %70 : vector<8x1xf32> to vector<8x8xf32>
    %72 = arith.mulf %67, %71 : vector<8x8xf32>
    %73 = arith.truncf %72 : vector<8x8xf32> to vector<8x8xbf16>
    %cst_42 = arith.constant dense<0.000000e+00> : vector<8x16xf32>
    %74 = tpu.matmul %73, %59, %cst_42 {dimension_numbers = #tpu.dot_dimension_numbers<[1], [0], [0], [1], [0, 0, 1, 1], [], []>} : vector<8x8xbf16>, vector<8x16xbf16>, vector<8x16xf32> -> vector<8x16xf32>
    %c0_43 = arith.constant 0 : index
    %c0_44 = arith.constant 0 : index
    %c16 = arith.constant 16 : index
    %75 = vector.load %arg7[%c0_43, %c0_44, %c16] : memref<1x8x64xf32, #tpu.memory_space<vmem>>, vector<1x8x16xf32>
    %76 = vector.shape_cast %75 : vector<1x8x16xf32> to vector<8x16xf32>
    %77 = vector.shape_cast %74 : vector<8x16xf32> to vector<1x8x16xf32>
    tpu.vector_store %arg7[%c0_43, %c0_44, %c16], %77 {strides = array<i32>} : memref<1x8x64xf32, #tpu.memory_space<vmem>>, vector<1x8x16xf32>,
    %c1_45 = arith.constant 1 : index
    %c0_46 = arith.constant 0 : index
    %c0_47 = arith.constant 0 : index
    %c0_48 = arith.constant 0 : index
    %78 = vector.load %arg8[%c1_45, %c0_46, %c0_47, %c0_48] : memref<4x1x8x8xf32, #tpu.memory_space<vmem>>, vector<1x1x8x8xf32>
    %79 = vector.shape_cast %78 : vector<1x1x8x8xf32> to vector<8x8xf32>
    %80 = vector.shape_cast %72 : vector<8x8xf32> to vector<1x1x8x8xf32>
    tpu.vector_store %arg8[%c1_45, %c0_46, %c0_47, %c0_48], %80 {strides = array<i32>} : memref<4x1x8x8xf32, #tpu.memory_space<vmem>>, vector<1x1x8x8xf32>,
    %81 = vector.extract_strided_slice %30 {offsets = [0, 32], sizes = [8, 16], strides = [1, 1]} : vector<8x64xbf16> to vector<8x16xbf16>
    %82 = vector.extract_strided_slice %31 {offsets = [0, 32], sizes = [8, 16], strides = [1, 1]} : vector<8x64xbf16> to vector<8x16xbf16>
    %83 = vector.extract_strided_slice %32 {offsets = [0, 32], sizes = [8, 16], strides = [1, 1]} : vector<8x64xbf16> to vector<8x16xbf16>
    "tpu.trace_start"() <{level = 10 : i32, message = "qd,kd->qk"}> : () -> ()
    %cst_49 = arith.constant dense<0.000000e+00> : vector<8x8xf32>
    %84 = tpu.matmul %81, %82, %cst_49 {dimension_numbers = #tpu.dot_dimension_numbers<[1], [1], [0], [0], [0, 0, 1, 0], [], []>} : vector<8x16xbf16>, vector<8x16xbf16>, vector<8x8xf32> -> vector<8x8xf32>
    "tpu.trace_stop"() : () -> ()
    %cst_50 = arith.constant 2.500000e-01 : f32
    %85 = vector.broadcast %cst_50 : f32 to vector<8x8xf32>
    %86 = arith.mulf %84, %85 : vector<8x8xf32>
    %cst_51 = arith.constant dense<0xFF800000> : vector<8xf32>
    %87 = vector.multi_reduction <maximumf>, %86, %cst_51 [1] : vector<8x8xf32> to vector<8xf32>
    %88 = vector.shape_cast %87 : vector<8xf32> to vector<8x1xf32>
    %89 = vector.broadcast %88 : vector<8x1xf32> to vector<8x8xf32>
    %90 = arith.subf %86, %89 : vector<8x8xf32>
    %91 = math.exp %90 : vector<8x8xf32>
    %cst_52 = arith.constant dense<0.000000e+00> : vector<8xf32>
    %92 = vector.multi_reduction <add>, %91, %cst_52 [1] : vector<8x8xf32> to vector<8xf32>
    %93 = vector.shape_cast %92 : vector<8xf32> to vector<8x1xf32>
    %94 = tpu.reciprocal %93 {approx = true} : vector<8x1xf32> -> vector<8x1xf32>
    %95 = vector.broadcast %94 : vector<8x1xf32> to vector<8x8xf32>
    %96 = arith.mulf %91, %95 : vector<8x8xf32>
    %97 = arith.truncf %96 : vector<8x8xf32> to vector<8x8xbf16>
    %cst_53 = arith.constant dense<0.000000e+00> : vector<8x16xf32>
    %98 = tpu.matmul %97, %83, %cst_53 {dimension_numbers = #tpu.dot_dimension_numbers<[1], [0], [0], [1], [0, 0, 1, 1], [], []>} : vector<8x8xbf16>, vector<8x16xbf16>, vector<8x16xf32> -> vector<8x16xf32>
    %c0_54 = arith.constant 0 : index
    %c0_55 = arith.constant 0 : index
    %c32 = arith.constant 32 : index
    %99 = vector.load %arg7[%c0_54, %c0_55, %c32] : memref<1x8x64xf32, #tpu.memory_space<vmem>>, vector<1x8x16xf32>
    %100 = vector.shape_cast %99 : vector<1x8x16xf32> to vector<8x16xf32>
    %101 = vector.shape_cast %98 : vector<8x16xf32> to vector<1x8x16xf32>
    tpu.vector_store %arg7[%c0_54, %c0_55, %c32], %101 {strides = array<i32>} : memref<1x8x64xf32, #tpu.memory_space<vmem>>, vector<1x8x16xf32>,
    %c2_56 = arith.constant 2 : index
    %c0_57 = arith.constant 0 : index
    %c0_58 = arith.constant 0 : index
    %c0_59 = arith.constant 0 : index
    %102 = vector.load %arg8[%c2_56, %c0_57, %c0_58, %c0_59] : memref<4x1x8x8xf32, #tpu.memory_space<vmem>>, vector<1x1x8x8xf32>
    %103 = vector.shape_cast %102 : vector<1x1x8x8xf32> to vector<8x8xf32>
    %104 = vector.shape_cast %96 : vector<8x8xf32> to vector<1x1x8x8xf32>
    tpu.vector_store %arg8[%c2_56, %c0_57, %c0_58, %c0_59], %104 {strides = array<i32>} : memref<4x1x8x8xf32, #tpu.memory_space<vmem>>, vector<1x1x8x8xf32>,
    %105 = vector.extract_strided_slice %30 {offsets = [0, 48], sizes = [8, 16], strides = [1, 1]} : vector<8x64xbf16> to vector<8x16xbf16>
    %106 = vector.extract_strided_slice %31 {offsets = [0, 48], sizes = [8, 16], strides = [1, 1]} : vector<8x64xbf16> to vector<8x16xbf16>
    %107 = vector.extract_strided_slice %32 {offsets = [0, 48], sizes = [8, 16], strides = [1, 1]} : vector<8x64xbf16> to vector<8x16xbf16>
    "tpu.trace_start"() <{level = 10 : i32, message = "qd,kd->qk"}> : () -> ()
    %cst_60 = arith.constant dense<0.000000e+00> : vector<8x8xf32>
    %108 = tpu.matmul %105, %106, %cst_60 {dimension_numbers = #tpu.dot_dimension_numbers<[1], [1], [0], [0], [0, 0, 1, 0], [], []>} : vector<8x16xbf16>, vector<8x16xbf16>, vector<8x8xf32> -> vector<8x8xf32>
    "tpu.trace_stop"() : () -> ()
    %cst_61 = arith.constant 2.500000e-01 : f32
    %109 = vector.broadcast %cst_61 : f32 to vector<8x8xf32>
    %110 = arith.mulf %108, %109 : vector<8x8xf32>
    %cst_62 = arith.constant dense<0xFF800000> : vector<8xf32>
    %111 = vector.multi_reduction <maximumf>, %110, %cst_62 [1] : vector<8x8xf32> to vector<8xf32>
    %112 = vector.shape_cast %111 : vector<8xf32> to vector<8x1xf32>
    %113 = vector.broadcast %112 : vector<8x1xf32> to vector<8x8xf32>
    %114 = arith.subf %110, %113 : vector<8x8xf32>
    %115 = math.exp %114 : vector<8x8xf32>
    %cst_63 = arith.constant dense<0.000000e+00> : vector<8xf32>
    %116 = vector.multi_reduction <add>, %115, %cst_63 [1] : vector<8x8xf32> to vector<8xf32>
    %117 = vector.shape_cast %116 : vector<8xf32> to vector<8x1xf32>
    %118 = tpu.reciprocal %117 {approx = true} : vector<8x1xf32> -> vector<8x1xf32>
    %119 = vector.broadcast %118 : vector<8x1xf32> to vector<8x8xf32>
    %120 = arith.mulf %115, %119 : vector<8x8xf32>
    %121 = arith.truncf %120 : vector<8x8xf32> to vector<8x8xbf16>
    %cst_64 = arith.constant dense<0.000000e+00> : vector<8x16xf32>
    %122 = tpu.matmul %121, %107, %cst_64 {dimension_numbers = #tpu.dot_dimension_numbers<[1], [0], [0], [1], [0, 0, 1, 1], [], []>} : vector<8x8xbf16>, vector<8x16xbf16>, vector<8x16xf32> -> vector<8x16xf32>
    %c0_65 = arith.constant 0 : index
    %c0_66 = arith.constant 0 : index
    %c48 = arith.constant 48 : index
    %123 = vector.load %arg7[%c0_65, %c0_66, %c48] : memref<1x8x64xf32, #tpu.memory_space<vmem>>, vector<1x8x16xf32>
    %124 = vector.shape_cast %123 : vector<1x8x16xf32> to vector<8x16xf32>
    %125 = vector.shape_cast %122 : vector<8x16xf32> to vector<1x8x16xf32>
    tpu.vector_store %arg7[%c0_65, %c0_66, %c48], %125 {strides = array<i32>} : memref<1x8x64xf32, #tpu.memory_space<vmem>>, vector<1x8x16xf32>,
    %c3 = arith.constant 3 : index
    %c0_67 = arith.constant 0 : index
    %c0_68 = arith.constant 0 : index
    %c0_69 = arith.constant 0 : index
    %126 = vector.load %arg8[%c3, %c0_67, %c0_68, %c0_69] : memref<4x1x8x8xf32, #tpu.memory_space<vmem>>, vector<1x1x8x8xf32>
    %127 = vector.shape_cast %126 : vector<1x1x8x8xf32> to vector<8x8xf32>
    %128 = vector.shape_cast %120 : vector<8x8xf32> to vector<1x1x8x8xf32>
    tpu.vector_store %arg8[%c3, %c0_67, %c0_68, %c0_69], %128 {strides = array<i32>} : memref<4x1x8x8xf32, #tpu.memory_space<vmem>>, vector<1x1x8x8xf32>,
    return
  }
  func.func @transform_0(%arg0: i32, %arg1: i32) -> (i32, i32, i32) {
    %c0_i32 = arith.constant 0 : i32
    %c0_i32_0 = arith.constant 0 : i32
    return %arg0, %arg1, %c0_i32 : i32, i32, i32
  }
  func.func @transform_1(%arg0: i32, %arg1: i32) -> (i32, i32, i32) {
    %c0_i32 = arith.constant 0 : i32
    %c0_i32_0 = arith.constant 0 : i32
    %c0_i32_1 = arith.constant 0 : i32
    return %arg0, %c0_i32, %c0_i32_0 : i32, i32, i32
  }
  func.func @transform_2(%arg0: i32, %arg1: i32) -> (i32, i32, i32) {
    %c0_i32 = arith.constant 0 : i32
    %c0_i32_0 = arith.constant 0 : i32
    %c0_i32_1 = arith.constant 0 : i32
    return %arg0, %c0_i32, %c0_i32_0 : i32, i32, i32
  }
  func.func @transform_3(%arg0: i32, %arg1: i32) -> (i32, i32, i32) {
    %c0_i32 = arith.constant 0 : i32
    %c0_i32_0 = arith.constant 0 : i32
    %c0_i32_1 = arith.constant 0 : i32
    %c0_i32_2 = arith.constant 0 : i32
    return %c0_i32, %c0_i32_0, %c0_i32_1 : i32, i32, i32
  }
  func.func @transform_4(%arg0: i32, %arg1: i32) -> (i32, i32, i32) {
    %c0_i32 = arith.constant 0 : i32
    %c0_i32_0 = arith.constant 0 : i32
    %c0_i32_1 = arith.constant 0 : i32
    %c0_i32_2 = arith.constant 0 : i32
    return %c0_i32, %c0_i32_0, %c0_i32_1 : i32, i32, i32
  }
  func.func @transform_5(%arg0: i32, %arg1: i32) -> (i32, i32, i32) {
    %c0_i32 = arith.constant 0 : i32
    %c0_i32_0 = arith.constant 0 : i32
    return %arg0, %arg1, %c0_i32 : i32, i32, i32
  }
  func.func @transform_6(%arg0: i32, %arg1: i32) -> (i32, i32, i32, i32) {
    %c0_i32 = arith.constant 0 : i32
    %c0_i32_0 = arith.constant 0 : i32
    %c0_i32_1 = arith.constant 0 : i32
    return %c0_i32, %arg0, %arg1, %c0_i32_0 : i32, i32, i32, i32
  }
}

</mosaic_0001>

<llo_original>
// kernel: multi_head_attention_forward.1
$region0: #{multi_head_attention_forward.1}
  #allocation0 [shape = 'u32[]', space=smem, size = 0x4, offset = 0x4, fixed_abs, tag = 'smem constant byte address 0x4 - core index']
  #allocation1 [shape = 'u32[144,128]{1,0:T(1,128)}', space=vmem, size = 0x12000, scoped, tag = 'internal scratch']
  %s0 = inlined_call_operand.hbm [shape: f32[2,8,64], index: 0, kind: input, shape index: {}]
  %s1 = inlined_call_operand.hbm [shape: f32[2,8,64], index: 1, kind: input, shape index: {}]
  %s2 = inlined_call_operand.hbm [shape: f32[2,8,64], index: 2, kind: input, shape index: {}]
  %s3 = inlined_call_operand.hbm [shape: bf16[3,64,64], index: 3, kind: input, shape index: {}]
  %s4 = inlined_call_operand.hbm [shape: f32[3,1,64], index: 4, kind: input, shape index: {}]
  %s5 = inlined_call_operand.hbm [shape: f32[2,8,64], index: 5, kind: output, shape index: {0}]
  %s6 = inlined_call_operand.hbm [shape: f32[4,2,8,8], index: 6, kind: output, shape index: {1}]
  %7 = xla_tuple %s5, %s6
  %s8 = sld [smem:[#allocation0]]
  $region81: #{multi_head_attention_forward.1} parent=0
    _
  %s10 = ssub.s32 1, %s8
  %s11 = scalar_select 0, %s10, %s8
  $region1: #{multi_head_attention_forward.1} parent=0
    #allocation2 [shape = 'u8[8192]{0}', space=vmem, size = 0x2000, scoped, tag = 'input window, operand 0']
    #allocation3 [shape = 's32[2]{0}', space=sflag, size = 0x8, scoped, tag = 'scoped memory for multi_head_attention_forward.1']
    #allocation4 [shape = 's32[2]{0}', space=sflag, size = 0x8, scoped, tag = 'scoped memory for multi_head_attention_forward.1']
    #allocation5 [shape = 'u8[8192]{0}', space=vmem, size = 0x2000, scoped, tag = 'input window, operand 1']
    #allocation6 [shape = 's32[2]{0}', space=sflag, size = 0x8, scoped, tag = 'scoped memory for multi_head_attention_forward.1']
    #allocation7 [shape = 'u8[8192]{0}', space=vmem, size = 0x2000, scoped, tag = 'input window, operand 2']
    #allocation8 [shape = 'u8[49152]{0}', space=vmem, size = 0xc000, scoped, tag = 'input window, operand 3, single buffered']
    #allocation9 [shape = 's32[1]{0}', space=sflag, size = 0x4, scoped, tag = 'scoped memory for multi_head_attention_forward.1']
    #allocation10 [shape = 'u8[1536]{0}', space=vmem, size = 0x800, scoped, tag = 'input window, operand 4, single buffered']
    #allocation11 [shape = 'u8[8192]{0}', space=vmem, size = 0x2000, scoped, tag = 'output window, operand 0']
    #allocation12 [shape = 'u8[32768]{0}', space=vmem, size = 0x8000, scoped, tag = 'output window, operand 1']
    #allocation13 [shape = 's32[2]{0}', space=sflag, size = 0x8, scoped, tag = 'scoped memory for multi_head_attention_forward.1']
    %12 = vsyncpa [#allocation3], 0
    %s13 = scalar_lea.sflag [#allocation3], 1
    %14 = vsyncpa %s13, 0
    %15 = vsyncpa [#allocation6], 0
    %s16 = scalar_lea.sflag [#allocation6], 1
    %17 = vsyncpa %s16, 0
    %18 = vsyncpa [#allocation9], 0
    %19 = vsyncpa [#allocation4], 0
    %s20 = scalar_lea.sflag [#allocation4], 1
    %21 = vsyncpa %s20, 0
    %22 = vsyncpa [#allocation13], 0
    %s23 = scalar_lea.sflag [#allocation13], 1
    %24 = vsyncpa %s23, 0
    loop: start=0, step=1, limit=4
    $region2: #{multi_head_attention_forward.1} parent=1 // loop_pre_header
      _
    $region3: #{multi_head_attention_forward.1} parent=1 // loop_header
      %s26 = sphi 0, %s30
      %p27 = scmp.ge.s32.totalorder %s26, 4
      %s33 = sphi 0, %s45
      %s34 = sphi 0, %s41
      %s35 = sphi 0, %s33
      %s36 = sphi 0, %s34
      %s37 = sphi 0, %s35
      %s38 = sphi 0, %s36
      %s50 = sphi 0, %s52
      %s53 = sphi 0, %s50
      %s54 = sphi 0, %s53
      %s70 = sphi 0, %s54
      %s76 = sphi 0, %s78
      %s79 = sphi 0, %s76
      %s80 = sphi 0, %s79
      %s96 = sphi 0, %s80
      %s102 = sphi 0, %s104
      %s105 = sphi 0, %s102
      %s106 = sphi 0, %s105
      %s122 = sphi 0, %s106
      %s126 = sphi 0, %s126
      %s128 = sphi 0, %s126
      %s129 = sphi 0, %s128
      %s143 = sphi 0, %s129
      %s147 = sphi 0, %s147
      %s149 = sphi 0, %s147
      %s150 = sphi 0, %s149
      %s164 = sphi 0, %s150
      %s172 = sphi 0, %s174
      %s175 = sphi 0, %s172
      %s176 = sphi 0, %s175
      %s192 = sphi 0, %s176
      %s200 = sphi 0, %s202
      %s203 = sphi 0, %s200
      %s204 = sphi 0, %s203
      %s220 = sphi 0, %s204
    $region4: #{multi_head_attention_forward.1} parent=1 // loop_header_branch
      %29 = sbr.rel (%p27) target = $region8
    $region5: #{multi_head_attention_forward.1} parent=1 // loop_body
      %s31 = ssub.s32 %s26, 1
      %s32 = ssub.s32 %s26, 2
      %s39 = sadd.s32 1, %s34
      %p40 = scmp.ge.s32.totalorder %s39, 1
      %s41 = scalar_select %p40, 0, %s39
      %s42 = sadd.s32 1, %s33
      %s43 = scalar_select %p40, %s42, %s33
      %p44 = scmp.ge.s32.totalorder %s43, 2
      %s45 = scalar_select %p44, 0, %s43
      %s46 = ssub.s32 %s33, %s45
      %s47 = ssub.s32 %s34, %s41
      %s48 = sor.u32 %s46, %s47
      %p49 = scmp.eq.s32.totalorder %s48, 0
      %s51 = sadd.s32 %s50, 1
      %s52 = scalar_select %p49, %s50, %s51
      %p55 = pneg %p49
      %p56 = scmp.eq.s32.totalorder %s26, 1
      %p57 = por %p55, %p56
      %p58 = scmp.ne.s32.totalorder %s50, %s53
      %p59 = scmp.eq.s32.totalorder %s26, 0
      %p60 = por %p58, %p59
      %p61 = scmp.ne.s32.totalorder %s50, %s53
      %p62 = scmp.eq.s32.totalorder %s31, 1
      %p63 = por %p61, %p62
      %p64 = scmp.ne.s32.totalorder %s53, %s54
      %p65 = scmp.eq.s32.totalorder %s31, 0
      %p66 = por %p64, %p65
      %p67 = scmp.ne.s32.totalorder %s53, %s54
      %p68 = scmp.eq.s32.totalorder %s32, 1
      %p69 = por %p67, %p68
      %p71 = scmp.ne.s32.totalorder %s54, %s70
      %p72 = scmp.eq.s32.totalorder %s32, 0
      %p73 = por %p71, %p72
      %s74 = ssub.s32 %s33, %s45
      %p75 = scmp.eq.s32.totalorder %s74, 0
      %s77 = sadd.s32 %s76, 1
      %s78 = scalar_select %p75, %s76, %s77
      %p81 = pneg %p75
      %p82 = scmp.eq.s32.totalorder %s26, 1
      %p83 = por %p81, %p82
      %p84 = scmp.ne.s32.totalorder %s76, %s79
      %p85 = scmp.eq.s32.totalorder %s26, 0
      %p86 = por %p84, %p85
      %p87 = scmp.ne.s32.totalorder %s76, %s79
      %p88 = scmp.eq.s32.totalorder %s31, 1
      %p89 = por %p87, %p88
      %p90 = scmp.ne.s32.totalorder %s79, %s80
      %p91 = scmp.eq.s32.totalorder %s31, 0
      %p92 = por %p90, %p91
      %p93 = scmp.ne.s32.totalorder %s79, %s80
      %p94 = scmp.eq.s32.totalorder %s32, 1
      %p95 = por %p93, %p94
      %p97 = scmp.ne.s32.totalorder %s80, %s96
      %p98 = scmp.eq.s32.totalorder %s32, 0
      %p99 = por %p97, %p98
      %s100 = ssub.s32 %s33, %s45
      %p101 = scmp.eq.s32.totalorder %s100, 0
      %s103 = sadd.s32 %s102, 1
      %s104 = scalar_select %p101, %s102, %s103
      %p107 = pneg %p101
      %p108 = scmp.eq.s32.totalorder %s26, 1
      %p109 = por %p107, %p108
      %p110 = scmp.ne.s32.totalorder %s102, %s105
      %p111 = scmp.eq.s32.totalorder %s26, 0
      %p112 = por %p110, %p111
      %p113 = scmp.ne.s32.totalorder %s102, %s105
      %p114 = scmp.eq.s32.totalorder %s31, 1
      %p115 = por %p113, %p114
      %p116 = scmp.ne.s32.totalorder %s105, %s106
      %p117 = scmp.eq.s32.totalorder %s31, 0
      %p118 = por %p116, %p117
      %p119 = scmp.ne.s32.totalorder %s105, %s106
      %p120 = scmp.eq.s32.totalorder %s32, 1
      %p121 = por %p119, %p120
      %p123 = scmp.ne.s32.totalorder %s106, %s122
      %p124 = scmp.eq.s32.totalorder %s32, 0
      %p125 = por %p123, %p124
      %s127 = sadd.s32 %s126, 1
      %p130 = scmp.eq.s32.totalorder %s26, 1
      %p131 = scmp.ne.s32.totalorder %s126, %s128
      %p132 = scmp.eq.s32.totalorder %s26, 0
      %p133 = por %p131, %p132
      %p134 = scmp.ne.s32.totalorder %s126, %s128
      %p135 = scmp.eq.s32.totalorder %s31, 1
      %p136 = por %p134, %p135
      %p137 = scmp.ne.s32.totalorder %s128, %s129
      %p138 = scmp.eq.s32.totalorder %s31, 0
      %p139 = por %p137, %p138
      %p140 = scmp.ne.s32.totalorder %s128, %s129
      %p141 = scmp.eq.s32.totalorder %s32, 1
      %p142 = por %p140, %p141
      %p144 = scmp.ne.s32.totalorder %s129, %s143
      %p145 = scmp.eq.s32.totalorder %s32, 0
      %p146 = por %p144, %p145
      %s148 = sadd.s32 %s147, 1
      %p151 = scmp.eq.s32.totalorder %s26, 1
      %p152 = scmp.ne.s32.totalorder %s147, %s149
      %p153 = scmp.eq.s32.totalorder %s26, 0
      %p154 = por %p152, %p153
      %p155 = scmp.ne.s32.totalorder %s147, %s149
      %p156 = scmp.eq.s32.totalorder %s31, 1
      %p157 = por %p155, %p156
      %p158 = scmp.ne.s32.totalorder %s149, %s150
      %p159 = scmp.eq.s32.totalorder %s31, 0
      %p160 = por %p158, %p159
      %p161 = scmp.ne.s32.totalorder %s149, %s150
      %p162 = scmp.eq.s32.totalorder %s32, 1
      %p163 = por %p161, %p162
      %p165 = scmp.ne.s32.totalorder %s150, %s164
      %p166 = scmp.eq.s32.totalorder %s32, 0
      %p167 = por %p165, %p166
      %s168 = ssub.s32 %s33, %s45
      %s169 = ssub.s32 %s34, %s41
      %s170 = sor.u32 %s168, %s169
      %p171 = scmp.eq.s32.totalorder %s170, 0
      %s173 = sadd.s32 %s172, 1
      %s174 = scalar_select %p171, %s172, %s173
      %p177 = pneg %p171
      %p178 = scmp.eq.s32.totalorder %s26, 1
      %p179 = por %p177, %p178
      %p180 = scmp.ne.s32.totalorder %s172, %s175
      %p181 = scmp.eq.s32.totalorder %s26, 0
      %p182 = por %p180, %p181
      %p183 = scmp.ne.s32.totalorder %s172, %s175
      %p184 = scmp.eq.s32.totalorder %s31, 1
      %p185 = por %p183, %p184
      %p186 = scmp.ne.s32.totalorder %s175, %s176
      %p187 = scmp.eq.s32.totalorder %s31, 0
      %p188 = por %p186, %p187
      %p189 = scmp.ne.s32.totalorder %s175, %s176
      %p190 = scmp.eq.s32.totalorder %s32, 1
      %p191 = por %p189, %p190
      %p193 = scmp.ne.s32.totalorder %s176, %s192
      %p194 = scmp.eq.s32.totalorder %s32, 0
      %p195 = por %p193, %p194
      %s196 = ssub.s32 %s33, %s45
      %s197 = ssub.s32 %s34, %s41
      %s198 = sor.u32 %s196, %s197
      %p199 = scmp.eq.s32.totalorder %s198, 0
      %s201 = sadd.s32 %s200, 1
      %s202 = scalar_select %p199, %s200, %s201
      %p205 = pneg %p199
      %p206 = scmp.eq.s32.totalorder %s26, 1
      %p207 = por %p205, %p206
      %p208 = scmp.ne.s32.totalorder %s200, %s203
      %p209 = scmp.eq.s32.totalorder %s26, 0
      %p210 = por %p208, %p209
      %p211 = scmp.ne.s32.totalorder %s200, %s203
      %p212 = scmp.eq.s32.totalorder %s31, 1
      %p213 = por %p211, %p212
      %p214 = scmp.ne.s32.totalorder %s203, %s204
      %p215 = scmp.eq.s32.totalorder %s31, 0
      %p216 = por %p214, %p215
      %p217 = scmp.ne.s32.totalorder %s203, %s204
      %p218 = scmp.eq.s32.totalorder %s32, 1
      %p219 = por %p217, %p218
      %p221 = scmp.ne.s32.totalorder %s204, %s220
      %p222 = scmp.eq.s32.totalorder %s32, 0
      %p223 = por %p221, %p222
      %p224 = scmp.le.s32.totalorder 1, %s26
      %p225 = scmp.lt.s32.totalorder %s26, 3
      %p226 = pnand %p224, %p225
      %p227 = pneg %p226
      // Predicated region
      $region9: #{multi_head_attention_forward.1} parent=5 // pred_check
        _
      $region10: #{multi_head_attention_forward.1} parent=5 // pred_check_branch
        %229 = sbr.rel (%p226) target = $region12
      $region11: #{multi_head_attention_forward.1} parent=5 // pred_region
        %s230 = ssub.s32 %s26, 1
        // Predicated region
        $region13: #{multi_head_attention_forward.1} parent=11 // pred_check
          %p231 = pneg %p139
        $region14: #{multi_head_attention_forward.1} parent=11 // pred_check_branch
          %233 = sbr.rel (%p231) target = $region16
        $region15: #{multi_head_attention_forward.1} parent=11 // pred_region
          %s235 = ssub.s32 1536, 1536
          %236 = vsyncadd [#allocation9], %s235
          %s237 = sshll.u32 [#allocation8], 4
          %s238 = int_to_ptr.vmem [resolvable:$true] %s237
          %243 = dma.hbm_to_vmem [thread:$0]  %s3, 1536, %s238, [#allocation9], 64, 64, 4
        $region16: #{multi_head_attention_forward.1} parent=11 // pred_fallthru
          _
        // Predicated region
        $region17: #{multi_head_attention_forward.1} parent=11 // pred_check
          %p244 = pneg %p160
        $region18: #{multi_head_attention_forward.1} parent=11 // pred_check_branch
          %246 = sbr.rel (%p244) target = $region20
        $region19: #{multi_head_attention_forward.1} parent=11 // pred_region
          %s248 = ssub.s32 48, 48
          %249 = vsyncadd [#allocation9], %s248
          %s250 = sshll.u32 [#allocation10], 4
          %s251 = int_to_ptr.vmem [resolvable:$true] %s250
          %256 = dma.hbm_to_vmem [thread:$0]  %s4, 48, %s251, [#allocation9], 16, 16, 1
        $region20: #{multi_head_attention_forward.1} parent=11 // pred_fallthru
          _
      $region12: #{multi_head_attention_forward.1} parent=5 // pred_fallthru
        _
      %p257 = scmp.lt.s32.totalorder %s26, 2
      // Predicated region
      $region21: #{multi_head_attention_forward.1} parent=5 // pred_check
        %p258 = pneg %p257
      $region22: #{multi_head_attention_forward.1} parent=5 // pred_check_branch
        %260 = sbr.rel (%p258) target = $region24
      $region23: #{multi_head_attention_forward.1} parent=5 // pred_region
        // Predicated region
        $region25: #{multi_head_attention_forward.1} parent=23 // pred_check
          %p261 = pneg %p60
        $region26: #{multi_head_attention_forward.1} parent=23 // pred_check_branch
          %263 = sbr.rel (%p261) target = $region28
        $region27: #{multi_head_attention_forward.1} parent=23 // pred_region
          %s264 = sand.u32 %s50, 1
          %s265 = scalar_lea.sflag [#allocation3], %s264
          %s266 = sand.u32 %s50, 1
          %s267 = smul.addr %s266, 8
          %s268 = scalar_lea.vmem [#allocation2], %s267
          %s270 = ssub.s32 128, 128
          %271 = vsyncadd %s265, %s270
          %s272 = sadd.s32 %s34, %s33
          %s273 = smul.addr %s272, 128
          %s274 = scalar_lea.hbm %s0, %s273
          %s276 = sshll.u32 %s268, 4
          %s277 = int_to_ptr.vmem [resolvable:$true] %s276
          %279 = dma.hbm_to_vmem [thread:$0]  %s274, 128, %s277, %s265
        $region28: #{multi_head_attention_forward.1} parent=23 // pred_fallthru
          _
        // Predicated region
        $region29: #{multi_head_attention_forward.1} parent=23 // pred_check
          %p280 = pneg %p86
        $region30: #{multi_head_attention_forward.1} parent=23 // pred_check_branch
          %282 = sbr.rel (%p280) target = $region32
        $region31: #{multi_head_attention_forward.1} parent=23 // pred_region
          %s283 = sand.u32 %s26, 1
          %s284 = scalar_lea.sflag [#allocation6], %s283
          %s285 = sand.u32 %s76, 1
          %s286 = smul.addr %s285, 8
          %s287 = scalar_lea.vmem [#allocation5], %s286
          %s289 = ssub.s32 128, 128
          %290 = vsyncadd %s284, %s289
          %s291 = smul.addr %s33, 128
          %s292 = scalar_lea.hbm %s1, %s291
          %s294 = sshll.u32 %s287, 4
          %s295 = int_to_ptr.vmem [resolvable:$true] %s294
          %297 = dma.hbm_to_vmem [thread:$0]  %s292, 128, %s295, %s284
        $region32: #{multi_head_attention_forward.1} parent=23 // pred_fallthru
          _
        // Predicated region
        $region33: #{multi_head_attention_forward.1} parent=23 // pred_check
          %p298 = pneg %p112
        $region34: #{multi_head_attention_forward.1} parent=23 // pred_check_branch
          %300 = sbr.rel (%p298) target = $region36
        $region35: #{multi_head_attention_forward.1} parent=23 // pred_region
          %s301 = sand.u32 %s26, 1
          %s302 = scalar_lea.sflag [#allocation6], %s301
          %s303 = sand.u32 %s102, 1
          %s304 = smul.addr %s303, 8
          %s305 = scalar_lea.vmem [#allocation7], %s304
          %s307 = ssub.s32 128, 128
          %308 = vsyncadd %s302, %s307
          %s309 = smul.addr %s33, 128
          %s310 = scalar_lea.hbm %s2, %s309
          %s312 = sshll.u32 %s305, 4
          %s313 = int_to_ptr.vmem [resolvable:$true] %s312
          %315 = dma.hbm_to_vmem [thread:$0]  %s310, 128, %s313, %s302
        $region36: #{multi_head_attention_forward.1} parent=23 // pred_fallthru
          _
      $region24: #{multi_head_attention_forward.1} parent=5 // pred_fallthru
        _
      %p316 = scmp.le.s32.totalorder 1, %s26
      %p317 = scmp.lt.s32.totalorder %s26, 3
      %p318 = pnand %p316, %p317
      %p319 = pneg %p318
      // Predicated region
      $region37: #{multi_head_attention_forward.1} parent=5 // pred_check
        _
      $region38: #{multi_head_attention_forward.1} parent=5 // pred_check_branch
        %321 = sbr.rel (%p318) target = $region40
      $region39: #{multi_head_attention_forward.1} parent=5 // pred_region
        %s322 = ssub.s32 %s26, 1
        %s323 = sand.u32 %s53, 1
        %s324 = scalar_lea.sflag [#allocation3], %s323
        %s325 = sand.u32 %s53, 1
        %s326 = smul.addr %s325, 8
        %s327 = scalar_lea.vmem [#allocation2], %s326
        // Predicated region
        $region41: #{multi_head_attention_forward.1} parent=39 // pred_check
          %p328 = pneg %p66
        $region42: #{multi_head_attention_forward.1} parent=39 // pred_check_branch
          %330 = sbr.rel (%p328) target = $region44
        $region43: #{multi_head_attention_forward.1} parent=39 // pred_region
          %331 = dma.done %s324, 128
        $region44: #{multi_head_attention_forward.1} parent=39 // pred_fallthru
          _
        %s332 = sand.u32 %s31, 1
        %s333 = scalar_lea.sflag [#allocation6], %s332
        %s334 = sand.u32 %s79, 1
        %s335 = smul.addr %s334, 8
        %s336 = scalar_lea.vmem [#allocation5], %s335
        // Predicated region
        $region45: #{multi_head_attention_forward.1} parent=39 // pred_check
          %p337 = pneg %p92
        $region46: #{multi_head_attention_forward.1} parent=39 // pred_check_branch
          %339 = sbr.rel (%p337) target = $region48
        $region47: #{multi_head_attention_forward.1} parent=39 // pred_region
          %340 = dma.done %s333, 128
        $region48: #{multi_head_attention_forward.1} parent=39 // pred_fallthru
          _
        %s341 = sand.u32 %s31, 1
        %s342 = scalar_lea.sflag [#allocation6], %s341
        %s343 = sand.u32 %s105, 1
        %s344 = smul.addr %s343, 8
        %s345 = scalar_lea.vmem [#allocation7], %s344
        // Predicated region
        $region49: #{multi_head_attention_forward.1} parent=39 // pred_check
          %p346 = pneg %p118
        $region50: #{multi_head_attention_forward.1} parent=39 // pred_check_branch
          %348 = sbr.rel (%p346) target = $region52
        $region51: #{multi_head_attention_forward.1} parent=39 // pred_region
          %349 = dma.done %s342, 128
        $region52: #{multi_head_attention_forward.1} parent=39 // pred_fallthru
          _
        // Predicated region
        $region53: #{multi_head_attention_forward.1} parent=39 // pred_check
          %p350 = pneg %p139
        $region54: #{multi_head_attention_forward.1} parent=39 // pred_check_branch
          %352 = sbr.rel (%p350) target = $region56
        $region55: #{multi_head_attention_forward.1} parent=39 // pred_region
          %353 = dma.done [#allocation9], 1536
        $region56: #{multi_head_attention_forward.1} parent=39 // pred_fallthru
          _
        // Predicated region
        $region57: #{multi_head_attention_forward.1} parent=39 // pred_check
          %p354 = pneg %p160
        $region58: #{multi_head_attention_forward.1} parent=39 // pred_check_branch
          %356 = sbr.rel (%p354) target = $region60
        $region59: #{multi_head_attention_forward.1} parent=39 // pred_region
          %357 = dma.done [#allocation9], 48
        $region60: #{multi_head_attention_forward.1} parent=39 // pred_fallthru
          _
        %s358 = sand.u32 %s53, 1
        %s359 = scalar_lea.sflag [#allocation3], %s358
        %s360 = sand.u32 %s53, 1
        %s361 = smul.addr %s360, 8
        %s362 = scalar_lea.vmem [#allocation2], %s361
        %p363 = pneg %p66
        %p364 = pneg %p63
        %s365 = sand.u32 %s31, 1
        %s366 = scalar_lea.sflag [#allocation6], %s365
        %s367 = sand.u32 %s79, 1
        %s368 = smul.addr %s367, 8
        %s369 = scalar_lea.vmem [#allocation5], %s368
        %p370 = pneg %p92
        %p371 = pneg %p89
        %s372 = sand.u32 %s31, 1
        %s373 = scalar_lea.sflag [#allocation6], %s372
        %s374 = sand.u32 %s105, 1
        %s375 = smul.addr %s374, 8
        %s376 = scalar_lea.vmem [#allocation7], %s375
        %p377 = pneg %p118
        %p378 = pneg %p115
        %p379 = pneg %p139
        %p380 = pneg %p136
        %p381 = pneg %p160
        %p382 = pneg %p157
        %p383 = pneg %p188
        %p384 = pneg %p185
        %s385 = sand.u32 %s175, 1
        %s386 = scalar_lea.sflag [#allocation4], %s385
        %s387 = sand.u32 %s175, 1
        %s388 = smul.addr %s387, 8
        %s389 = scalar_lea.vmem [#allocation11], %s388
        %p390 = pneg %p216
        %p391 = pneg %p213
        %s392 = sand.u32 %s203, 1
        %s393 = scalar_lea.sflag [#allocation13], %s392
        %s394 = sand.u32 %s203, 1
        %s395 = smul.addr %s394, 32
        %s396 = scalar_lea.vmem [#allocation12], %s395
        %v398 = vld [vmem:[%s327] sm:$0xff]
        %v399 = vpack.c.bf16 %v398, %v398
        %v400 = vld [vmem:[#allocation8] sm:$0xf]
        %v401 = vld [vmem:[#allocation8 + $0x4] sm:$0xf]
        %v402 = vld [vmem:[#allocation8 + $0x8] sm:$0xf]
        %v403 = vld [vmem:[#allocation8 + $0xc] sm:$0xf]
        %v404 = vld [vmem:[#allocation8 + $0x10] sm:$0xf]
        %v405 = vld [vmem:[#allocation8 + $0x14] sm:$0xf]
        %v406 = vld [vmem:[#allocation8 + $0x18] sm:$0xf]
        %v407 = vld [vmem:[#allocation8 + $0x1c] sm:$0xf]
        %v408 = vld [vmem:[#allocation10] sm:$0x1]
        %v410 = vlaneseq
        %v411 = vshrl.u32 %v410, 7
        %v412 = vsub.s32 0, %v411
        %v413 = vrot.slane %v408, %v412
        %v423 = vunpack.c.l.b16 %v400
        %v424 = vunpack.c.l.b16 %v401
        %v425 = vunpack.c.l.b16 %v402
        %v426 = vunpack.c.l.b16 %v403
        %v427 = vunpack.c.l.b16 %v404
        %v428 = vunpack.c.l.b16 %v405
        %v429 = vunpack.c.l.b16 %v406
        %v430 = vunpack.c.l.b16 %v407
        %v431 = vpack.c.b16 %v424, %v423
        %v432 = vpack.c.b16 %v426, %v425
        %v433 = vpack.c.b16 %v428, %v427
        %v434 = vpack.c.b16 %v430, %v429
        %vm439 = vcmask 523264
        %v441 = vsel %vm439, %v399, 0
        %443 = vmatprep.subr.bf16.mxu0 0
        %444 = vmatpush1.bf16.msra.mxu0 %v431
        %445 = vmatprep.subr.bf16.mxu0 0
        %446 = vmatpush1.bf16.msra.mxu0 %v432
        %447 = vmatprep.subr.bf16.mxu0 0
        %448 = vmatpush1.bf16.msra.mxu0 %v433
        %449 = vmatprep.subr.bf16.mxu0 0
        %450 = vmatpush1.bf16.msra.mxu0 %v434
        %451 = vmatprep.subr.bf16.mxu0 0
        %452 = vmatpush1.bf16.msra.mxu0 0
        %453 = vmatprep.subr.bf16.mxu0 0
        %454 = vmatpush1.bf16.msra.mxu0 0
        %455 = vmatprep.subr.bf16.mxu0 0
        %456 = vmatpush1.bf16.msra.mxu0 0
        %457 = vmatprep.subr.bf16.mxu0 0
        %458 = vmatpush1.bf16.msra.mxu0 0
        %459 = vmatprep.subr.bf16.mxu0 0
        %460 = vmatpush1.bf16.msra.mxu0 0
        %461 = vmatprep.subr.bf16.mxu0 0
        %462 = vmatpush1.bf16.msra.mxu0 0
        %463 = vmatprep.subr.bf16.mxu0 0
        %464 = vmatpush1.bf16.msra.mxu0 0
        %465 = vmatprep.subr.bf16.mxu0 0
        %466 = vmatpush1.bf16.msra.mxu0 0
        %467 = vmatprep.subr.bf16.mxu0 0
        %468 = vmatpush1.bf16.msra.mxu0 0
        %469 = vmatprep.subr.bf16.mxu0 0
        %470 = vmatpush1.bf16.msra.mxu0 0
        %471 = vmatprep.subr.bf16.mxu0 0
        %472 = vmatpush1.bf16.msra.mxu0 0
        %473 = vmatprep.subr.bf16.mxu0 0
        %474 = vmatpush1.bf16.msra.mxu0 0
        %475 = vmatprep.mubr.bf16.mxu0 0
        %476 = vmatmul.mubr.bf16.gmra.mrb[0].mxu0 %v441
        %v477 = vpop.f32.mrb[0].mxu0
        %v478 = vadd.f32 %v413, %v477
        %v479 = vpop.f32.mrb[0].mxu0
        %v480 = vpop.f32.mrb[0].mxu0
        %v481 = vpop.f32.mrb[0].mxu0
        %482 = vdwg.mxu0
        %v483 = vld [vmem:[%s336] sm:$0xff]
        %v484 = vpack.c.bf16 %v483, %v483
        %s485 = scalar_lea.vmem [#allocation8], 32
        %v486 = vld [vmem:[%s485] sm:$0xf]
        %v487 = vld [vmem:[%s485 + $0x4] sm:$0xf]
        %v488 = vld [vmem:[%s485 + $0x8] sm:$0xf]
        %v489 = vld [vmem:[%s485 + $0xc] sm:$0xf]
        %v490 = vld [vmem:[%s485 + $0x10] sm:$0xf]
        %v491 = vld [vmem:[%s485 + $0x14] sm:$0xf]
        %v492 = vld [vmem:[%s485 + $0x18] sm:$0xf]
        %v493 = vld [vmem:[%s485 + $0x1c] sm:$0xf]
        %s494 = scalar_lea.vmem [#allocation10], 1
        %v495 = vld [vmem:[%s494] sm:$0x1]
        %v497 = vlaneseq
        %v498 = vshrl.u32 %v497, 7
        %v499 = vsub.s32 0, %v498
        %v500 = vrot.slane %v495, %v499
        %v510 = vunpack.c.l.b16 %v486
        %v511 = vunpack.c.l.b16 %v487
        %v512 = vunpack.c.l.b16 %v488
        %v513 = vunpack.c.l.b16 %v489
        %v514 = vunpack.c.l.b16 %v490
        %v515 = vunpack.c.l.b16 %v491
        %v516 = vunpack.c.l.b16 %v492
        %v517 = vunpack.c.l.b16 %v493
        %v518 = vpack.c.b16 %v511, %v510
        %v519 = vpack.c.b16 %v513, %v512
        %v520 = vpack.c.b16 %v515, %v514
        %v521 = vpack.c.b16 %v517, %v516
        %v527 = vsel %vm439, %v484, 0
        %529 = vmatprep.subr.bf16.mxu0 0
        %530 = vmatpush1.bf16.msra.mxu0 %v518
        %531 = vmatprep.subr.bf16.mxu0 0
        %532 = vmatpush1.bf16.msra.mxu0 %v519
        %533 = vmatprep.subr.bf16.mxu0 0
        %534 = vmatpush1.bf16.msra.mxu0 %v520
        %535 = vmatprep.subr.bf16.mxu0 0
        %536 = vmatpush1.bf16.msra.mxu0 %v521
        %537 = vmatprep.subr.bf16.mxu0 0
        %538 = vmatpush1.bf16.msra.mxu0 0
        %539 = vmatprep.subr.bf16.mxu0 0
        %540 = vmatpush1.bf16.msra.mxu0 0
        %541 = vmatprep.subr.bf16.mxu0 0
        %542 = vmatpush1.bf16.msra.mxu0 0
        %543 = vmatprep.subr.bf16.mxu0 0
        %544 = vmatpush1.bf16.msra.mxu0 0
        %545 = vmatprep.subr.bf16.mxu0 0
        %546 = vmatpush1.bf16.msra.mxu0 0
        %547 = vmatprep.subr.bf16.mxu0 0
        %548 = vmatpush1.bf16.msra.mxu0 0
        %549 = vmatprep.subr.bf16.mxu0 0
        %550 = vmatpush1.bf16.msra.mxu0 0
        %551 = vmatprep.subr.bf16.mxu0 0
        %552 = vmatpush1.bf16.msra.mxu0 0
        %553 = vmatprep.subr.bf16.mxu0 0
        %554 = vmatpush1.bf16.msra.mxu0 0
        %555 = vmatprep.subr.bf16.mxu0 0
        %556 = vmatpush1.bf16.msra.mxu0 0
        %557 = vmatprep.subr.bf16.mxu0 0
        %558 = vmatpush1.bf16.msra.mxu0 0
        %559 = vmatprep.subr.bf16.mxu0 0
        %560 = vmatpush1.bf16.msra.mxu0 0
        %561 = vmatprep.mubr.bf16.mxu0 0
        %562 = vmatmul.mubr.bf16.gmra.mrb[0].mxu0 %v527
        %v563 = vpop.f32.mrb[0].mxu0
        %v564 = vadd.f32 %v500, %v563
        %v565 = vpop.f32.mrb[0].mxu0
        %v566 = vpop.f32.mrb[0].mxu0
        %v567 = vpop.f32.mrb[0].mxu0
        %568 = vdwg.mxu0
        %v569 = vld [vmem:[%s345] sm:$0xff]
        %v570 = vpack.c.bf16 %v569, %v569
        %s571 = scalar_lea.vmem [#allocation8], 64
        %v572 = vld [vmem:[%s571] sm:$0xf]
        %v573 = vld [vmem:[%s571 + $0x4] sm:$0xf]
        %v574 = vld [vmem:[%s571 + $0x8] sm:$0xf]
        %v575 = vld [vmem:[%s571 + $0xc] sm:$0xf]
        %v576 = vld [vmem:[%s571 + $0x10] sm:$0xf]
        %v577 = vld [vmem:[%s571 + $0x14] sm:$0xf]
        %v578 = vld [vmem:[%s571 + $0x18] sm:$0xf]
        %v579 = vld [vmem:[%s571 + $0x1c] sm:$0xf]
        %s580 = scalar_lea.vmem [#allocation10], 2
        %v581 = vld [vmem:[%s580] sm:$0x1]
        %v583 = vlaneseq
        %v584 = vshrl.u32 %v583, 7
        %v585 = vsub.s32 0, %v584
        %v586 = vrot.slane %v581, %v585
        %v596 = vunpack.c.l.b16 %v572
        %v597 = vunpack.c.l.b16 %v573
        %v598 = vunpack.c.l.b16 %v574
        %v599 = vunpack.c.l.b16 %v575
        %v600 = vunpack.c.l.b16 %v576
        %v601 = vunpack.c.l.b16 %v577
        %v602 = vunpack.c.l.b16 %v578
        %v603 = vunpack.c.l.b16 %v579
        %v604 = vpack.c.b16 %v597, %v596
        %v605 = vpack.c.b16 %v599, %v598
        %v606 = vpack.c.b16 %v601, %v600
        %v607 = vpack.c.b16 %v603, %v602
        %v613 = vsel %vm439, %v570, 0
        %615 = vmatprep.subr.bf16.mxu0 0
        %616 = vmatpush1.bf16.msra.mxu0 %v604
        %617 = vmatprep.subr.bf16.mxu0 0
        %618 = vmatpush1.bf16.msra.mxu0 %v605
        %619 = vmatprep.subr.bf16.mxu0 0
        %620 = vmatpush1.bf16.msra.mxu0 %v606
        %621 = vmatprep.subr.bf16.mxu0 0
        %622 = vmatpush1.bf16.msra.mxu0 %v607
        %623 = vmatprep.subr.bf16.mxu0 0
        %624 = vmatpush1.bf16.msra.mxu0 0
        %625 = vmatprep.subr.bf16.mxu0 0
        %626 = vmatpush1.bf16.msra.mxu0 0
        %627 = vmatprep.subr.bf16.mxu0 0
        %628 = vmatpush1.bf16.msra.mxu0 0
        %629 = vmatprep.subr.bf16.mxu0 0
        %630 = vmatpush1.bf16.msra.mxu0 0
        %631 = vmatprep.subr.bf16.mxu0 0
        %632 = vmatpush1.bf16.msra.mxu0 0
        %633 = vmatprep.subr.bf16.mxu0 0
        %634 = vmatpush1.bf16.msra.mxu0 0
        %635 = vmatprep.subr.bf16.mxu0 0
        %636 = vmatpush1.bf16.msra.mxu0 0
        %637 = vmatprep.subr.bf16.mxu0 0
        %638 = vmatpush1.bf16.msra.mxu0 0
        %639 = vmatprep.subr.bf16.mxu0 0
        %640 = vmatpush1.bf16.msra.mxu0 0
        %641 = vmatprep.subr.bf16.mxu0 0
        %642 = vmatpush1.bf16.msra.mxu0 0
        %643 = vmatprep.subr.bf16.mxu0 0
        %644 = vmatpush1.bf16.msra.mxu0 0
        %645 = vmatprep.subr.bf16.mxu0 0
        %646 = vmatpush1.bf16.msra.mxu0 0
        %647 = vmatprep.mubr.bf16.mxu0 0
        %648 = vmatmul.mubr.bf16.gmra.mrb[0].mxu0 %v613
        %v649 = vpop.f32.mrb[0].mxu0
        %v650 = vadd.f32 %v586, %v649
        %v651 = vpop.f32.mrb[0].mxu0
        %v652 = vpop.f32.mrb[0].mxu0
        %v653 = vpop.f32.mrb[0].mxu0
        %654 = vdwg.mxu0
        %v655 = vpack.c.bf16 %v478, %v478
        %v656 = vpack.c.bf16 %v564, %v564
        %v657 = vpack.c.bf16 %v650, %v650
        %vm658 = vcmask 130048
        %v660 = vsel %vm658, %v655, 0
        %v663 = vsel %vm658, %v656, 0
        %665 = vmatprep.subr.bf16.mxu0 0
        %666 = vmatpush1.bf16.xpose.msra.mxu0 %v663
        %667 = vmatprep.subr.bf16.mxu0 0
        %668 = vmatpush1.bf16.xpose.msra.mxu0 0
        %669 = vmatprep.subr.bf16.mxu0 0
        %670 = vmatpush1.bf16.xpose.msra.mxu0 0
        %671 = vmatprep.subr.bf16.mxu0 0
        %672 = vmatpush1.bf16.xpose.msra.mxu0 0
        %673 = vmatprep.subr.bf16.mxu0 0
        %674 = vmatpush1.bf16.xpose.msra.mxu0 0
        %675 = vmatprep.subr.bf16.mxu0 0
        %676 = vmatpush1.bf16.xpose.msra.mxu0 0
        %677 = vmatprep.subr.bf16.mxu0 0
        %678 = vmatpush1.bf16.xpose.msra.mxu0 0
        %679 = vmatprep.subr.bf16.mxu0 0
        %680 = vmatpush1.bf16.xpose.msra.mxu0 0
        %681 = vmatprep.subr.bf16.mxu0 0
        %682 = vmatpush1.bf16.xpose.msra.mxu0 0
        %683 = vmatprep.subr.bf16.mxu0 0
        %684 = vmatpush1.bf16.xpose.msra.mxu0 0
        %685 = vmatprep.subr.bf16.mxu0 0
        %686 = vmatpush1.bf16.xpose.msra.mxu0 0
        %687 = vmatprep.subr.bf16.mxu0 0
        %688 = vmatpush1.bf16.xpose.msra.mxu0 0
        %689 = vmatprep.subr.bf16.mxu0 0
        %690 = vmatpush1.bf16.xpose.msra.mxu0 0
        %691 = vmatprep.subr.bf16.mxu0 0
        %692 = vmatpush1.bf16.xpose.msra.mxu0 0
        %693 = vmatprep.subr.bf16.mxu0 0
        %694 = vmatpush1.bf16.xpose.msra.mxu0 0
        %695 = vmatprep.subr.bf16.mxu0 0
        %696 = vmatpush1.bf16.xpose.msra.mxu0 0
        %697 = vmatprep.mubr.bf16.mxu0 0
        %698 = vmatmul.mubr.bf16.gmra.mrb[0].mxu0 %v660
        %v699 = vpop.f32.mrb[0].mxu0
        %v700 = vadd.f32 0.0, %v699
        %v701 = vpop.f32.mrb[0].mxu0
        %v702 = vpop.f32.mrb[0].mxu0
        %v703 = vpop.f32.mrb[0].mxu0
        %704 = vdwg.mxu0
        %v705 = vmul.f32 %v700, 0.25
        %vm706 = vcmask 64512
        %v707 = vsel %vm706, %v705, -inf
        %708 = vmax.xlane.f32.xlu0 %v707
        %v709 = vpop.xlane.xlu0 %708
        %v710 = vsub.f32 %v705, %v709
        %v711 = vmul.f32 %v710, 1.442695
        %v712 = vpow.pop %v711
        %v713 = vsel %vm706, %v712, 0.0
        %714 = vadd.xlane.f32.xlu0 %v713
        %v715 = vpop.xlane.xlu0 %714
        %v716 = vrcp.pop %v715
        %v717 = vmul.f32 %v712, %v716
        %v718 = vpack.c.bf16 %v717, %v717
        %v720 = vsel %vm706, %v718, 0
        %vm722 = vcmask 1043456
        %v724 = vsel %vm722, %v657, 0
        %726 = vmatprep.subr.bf16.mxu0 0
        %727 = vmatpush1.bf16.msra.mxu0 %v724
        %728 = vmatprep.subr.bf16.mxu0 0
        %729 = vmatpush1.bf16.msra.mxu0 0
        %730 = vmatprep.subr.bf16.mxu0 0
        %731 = vmatpush1.bf16.msra.mxu0 0
        %732 = vmatprep.subr.bf16.mxu0 0
        %733 = vmatpush1.bf16.msra.mxu0 0
        %734 = vmatprep.subr.bf16.mxu0 0
        %735 = vmatpush1.bf16.msra.mxu0 0
        %736 = vmatprep.subr.bf16.mxu0 0
        %737 = vmatpush1.bf16.msra.mxu0 0
        %738 = vmatprep.subr.bf16.mxu0 0
        %739 = vmatpush1.bf16.msra.mxu0 0
        %740 = vmatprep.subr.bf16.mxu0 0
        %741 = vmatpush1.bf16.msra.mxu0 0
        %742 = vmatprep.subr.bf16.mxu0 0
        %743 = vmatpush1.bf16.msra.mxu0 0
        %744 = vmatprep.subr.bf16.mxu0 0
        %745 = vmatpush1.bf16.msra.mxu0 0
        %746 = vmatprep.subr.bf16.mxu0 0
        %747 = vmatpush1.bf16.msra.mxu0 0
        %748 = vmatprep.subr.bf16.mxu0 0
        %749 = vmatpush1.bf16.msra.mxu0 0
        %750 = vmatprep.subr.bf16.mxu0 0
        %751 = vmatpush1.bf16.msra.mxu0 0
        %752 = vmatprep.subr.bf16.mxu0 0
        %753 = vmatpush1.bf16.msra.mxu0 0
        %754 = vmatprep.subr.bf16.mxu0 0
        %755 = vmatpush1.bf16.msra.mxu0 0
        %756 = vmatprep.subr.bf16.mxu0 0
        %757 = vmatpush1.bf16.msra.mxu0 0
        %758 = vmatprep.mubr.bf16.mxu0 0
        %759 = vmatmul.mubr.bf16.gmra.mrb[0].mxu0 %v720
        %v760 = vpop.f32.mrb[0].mxu0
        %v761 = vadd.f32 0.0, %v760
        %v762 = vpop.f32.mrb[0].mxu0
        %v763 = vpop.f32.mrb[0].mxu0
        %v764 = vpop.f32.mrb[0].mxu0
        %765 = vdwg.mxu0
        %766 = vst.msk [vmem:[%s389] sm:$0xff] %vm658, %v761
        %767 = vst.msk [vmem:[%s396] sm:$0xff] %vm706, %v717
        %769 = vrot.lane.b32.xlu0 %v655, 112
        %v770 = vpop.permute.xlu0 %769
        %772 = vrot.lane.b32.xlu0 %v656, 112
        %v773 = vpop.permute.xlu0 %772
        %v775 = vsel %vm658, %v770, 0
        %v778 = vsel %vm658, %v773, 0
        %780 = vmatprep.subr.bf16.mxu0 0
        %781 = vmatpush1.bf16.xpose.msra.mxu0 %v778
        %782 = vmatprep.subr.bf16.mxu0 0
        %783 = vmatpush1.bf16.xpose.msra.mxu0 0
        %784 = vmatprep.subr.bf16.mxu0 0
        %785 = vmatpush1.bf16.xpose.msra.mxu0 0
        %786 = vmatprep.subr.bf16.mxu0 0
        %787 = vmatpush1.bf16.xpose.msra.mxu0 0
        %788 = vmatprep.subr.bf16.mxu0 0
        %789 = vmatpush1.bf16.xpose.msra.mxu0 0
        %790 = vmatprep.subr.bf16.mxu0 0
        %791 = vmatpush1.bf16.xpose.msra.mxu0 0
        %792 = vmatprep.subr.bf16.mxu0 0
        %793 = vmatpush1.bf16.xpose.msra.mxu0 0
        %794 = vmatprep.subr.bf16.mxu0 0
        %795 = vmatpush1.bf16.xpose.msra.mxu0 0
        %796 = vmatprep.subr.bf16.mxu0 0
        %797 = vmatpush1.bf16.xpose.msra.mxu0 0
        %798 = vmatprep.subr.bf16.mxu0 0
        %799 = vmatpush1.bf16.xpose.msra.mxu0 0
        %800 = vmatprep.subr.bf16.mxu0 0
        %801 = vmatpush1.bf16.xpose.msra.mxu0 0
        %802 = vmatprep.subr.bf16.mxu0 0
        %803 = vmatpush1.bf16.xpose.msra.mxu0 0
        %804 = vmatprep.subr.bf16.mxu0 0
        %805 = vmatpush1.bf16.xpose.msra.mxu0 0
        %806 = vmatprep.subr.bf16.mxu0 0
        %807 = vmatpush1.bf16.xpose.msra.mxu0 0
        %808 = vmatprep.subr.bf16.mxu0 0
        %809 = vmatpush1.bf16.xpose.msra.mxu0 0
        %810 = vmatprep.subr.bf16.mxu0 0
        %811 = vmatpush1.bf16.xpose.msra.mxu0 0
        %812 = vmatprep.mubr.bf16.mxu0 0
        %813 = vmatmul.mubr.bf16.gmra.mrb[0].mxu0 %v775
        %v814 = vpop.f32.mrb[0].mxu0
        %v815 = vadd.f32 0.0, %v814
        %v816 = vpop.f32.mrb[0].mxu0
        %v817 = vpop.f32.mrb[0].mxu0
        %v818 = vpop.f32.mrb[0].mxu0
        %819 = vdwg.mxu0
        %v820 = vmul.f32 %v815, 0.25
        %v821 = vsel %vm706, %v820, -inf
        %822 = vmax.xlane.f32.xlu0 %v821
        %v823 = vpop.xlane.xlu0 %822
        %v824 = vsub.f32 %v820, %v823
        %v825 = vmul.f32 %v824, 1.442695
        %v826 = vpow.pop %v825
        %v827 = vsel %vm706, %v826, 0.0
        %828 = vadd.xlane.f32.xlu0 %v827
        %v829 = vpop.xlane.xlu0 %828
        %v830 = vrcp.pop %v829
        %v831 = vmul.f32 %v826, %v830
        %v832 = vpack.c.bf16 %v831, %v831
        %834 = vrot.lane.b32.xlu0 %v657, 112
        %v835 = vpop.permute.xlu0 %834
        %v837 = vsel %vm706, %v832, 0
        %v840 = vsel %vm722, %v835, 0
        %842 = vmatprep.subr.bf16.mxu0 0
        %843 = vmatpush1.bf16.msra.mxu0 %v840
        %844 = vmatprep.subr.bf16.mxu0 0
        %845 = vmatpush1.bf16.msra.mxu0 0
        %846 = vmatprep.subr.bf16.mxu0 0
        %847 = vmatpush1.bf16.msra.mxu0 0
        %848 = vmatprep.subr.bf16.mxu0 0
        %849 = vmatpush1.bf16.msra.mxu0 0
        %850 = vmatprep.subr.bf16.mxu0 0
        %851 = vmatpush1.bf16.msra.mxu0 0
        %852 = vmatprep.subr.bf16.mxu0 0
        %853 = vmatpush1.bf16.msra.mxu0 0
        %854 = vmatprep.subr.bf16.mxu0 0
        %855 = vmatpush1.bf16.msra.mxu0 0
        %856 = vmatprep.subr.bf16.mxu0 0
        %857 = vmatpush1.bf16.msra.mxu0 0
        %858 = vmatprep.subr.bf16.mxu0 0
        %859 = vmatpush1.bf16.msra.mxu0 0
        %860 = vmatprep.subr.bf16.mxu0 0
        %861 = vmatpush1.bf16.msra.mxu0 0
        %862 = vmatprep.subr.bf16.mxu0 0
        %863 = vmatpush1.bf16.msra.mxu0 0
        %864 = vmatprep.subr.bf16.mxu0 0
        %865 = vmatpush1.bf16.msra.mxu0 0
        %866 = vmatprep.subr.bf16.mxu0 0
        %867 = vmatpush1.bf16.msra.mxu0 0
        %868 = vmatprep.subr.bf16.mxu0 0
        %869 = vmatpush1.bf16.msra.mxu0 0
        %870 = vmatprep.subr.bf16.mxu0 0
        %871 = vmatpush1.bf16.msra.mxu0 0
        %872 = vmatprep.subr.bf16.mxu0 0
        %873 = vmatpush1.bf16.msra.mxu0 0
        %874 = vmatprep.mubr.bf16.mxu0 0
        %875 = vmatmul.mubr.bf16.gmra.mrb[0].mxu0 %v837
        %v876 = vpop.f32.mrb[0].mxu0
        %v877 = vadd.f32 0.0, %v876
        %v878 = vpop.f32.mrb[0].mxu0
        %v879 = vpop.f32.mrb[0].mxu0
        %v880 = vpop.f32.mrb[0].mxu0
        %881 = vdwg.mxu0
        %883 = vrot.lane.b32.xlu0 %v877, 16
        %v884 = vpop.permute.xlu0 %883
        %vm886 = vcmask 261248
        %887 = vst.msk [vmem:[%s389] sm:$0xff] %vm886, %v884
        %s888 = scalar_lea.vmem %s396, 8 [#allocation12]
        %889 = vst.msk [vmem:[%s888] sm:$0xff] %vm706, %v831
        %890 = vrot.lane.b32.xlu0 %v655, 96
        %v891 = vpop.permute.xlu0 %890
        %892 = vrot.lane.b32.xlu0 %v656, 96
        %v893 = vpop.permute.xlu0 %892
        %v895 = vsel %vm658, %v891, 0
        %v898 = vsel %vm658, %v893, 0
        %900 = vmatprep.subr.bf16.mxu0 0
        %901 = vmatpush1.bf16.xpose.msra.mxu0 %v898
        %902 = vmatprep.subr.bf16.mxu0 0
        %903 = vmatpush1.bf16.xpose.msra.mxu0 0
        %904 = vmatprep.subr.bf16.mxu0 0
        %905 = vmatpush1.bf16.xpose.msra.mxu0 0
        %906 = vmatprep.subr.bf16.mxu0 0
        %907 = vmatpush1.bf16.xpose.msra.mxu0 0
        %908 = vmatprep.subr.bf16.mxu0 0
        %909 = vmatpush1.bf16.xpose.msra.mxu0 0
        %910 = vmatprep.subr.bf16.mxu0 0
        %911 = vmatpush1.bf16.xpose.msra.mxu0 0
        %912 = vmatprep.subr.bf16.mxu0 0
        %913 = vmatpush1.bf16.xpose.msra.mxu0 0
        %914 = vmatprep.subr.bf16.mxu0 0
        %915 = vmatpush1.bf16.xpose.msra.mxu0 0
        %916 = vmatprep.subr.bf16.mxu0 0
        %917 = vmatpush1.bf16.xpose.msra.mxu0 0
        %918 = vmatprep.subr.bf16.mxu0 0
        %919 = vmatpush1.bf16.xpose.msra.mxu0 0
        %920 = vmatprep.subr.bf16.mxu0 0
        %921 = vmatpush1.bf16.xpose.msra.mxu0 0
        %922 = vmatprep.subr.bf16.mxu0 0
        %923 = vmatpush1.bf16.xpose.msra.mxu0 0
        %924 = vmatprep.subr.bf16.mxu0 0
        %925 = vmatpush1.bf16.xpose.msra.mxu0 0
        %926 = vmatprep.subr.bf16.mxu0 0
        %927 = vmatpush1.bf16.xpose.msra.mxu0 0
        %928 = vmatprep.subr.bf16.mxu0 0
        %929 = vmatpush1.bf16.xpose.msra.mxu0 0
        %930 = vmatprep.subr.bf16.mxu0 0
        %931 = vmatpush1.bf16.xpose.msra.mxu0 0
        %932 = vmatprep.mubr.bf16.mxu0 0
        %933 = vmatmul.mubr.bf16.gmra.mrb[0].mxu0 %v895
        %v934 = vpop.f32.mrb[0].mxu0
        %v935 = vadd.f32 0.0, %v934
        %v936 = vpop.f32.mrb[0].mxu0
        %v937 = vpop.f32.mrb[0].mxu0
        %v938 = vpop.f32.mrb[0].mxu0
        %939 = vdwg.mxu0
        %v940 = vmul.f32 %v935, 0.25
        %v941 = vsel %vm706, %v940, -inf
        %942 = vmax.xlane.f32.xlu0 %v941
        %v943 = vpop.xlane.xlu0 %942
        %v944 = vsub.f32 %v940, %v943
        %v945 = vmul.f32 %v944, 1.442695
        %v946 = vpow.pop %v945
        %v947 = vsel %vm706, %v946, 0.0
        %948 = vadd.xlane.f32.xlu0 %v947
        %v949 = vpop.xlane.xlu0 %948
        %v950 = vrcp.pop %v949
        %v951 = vmul.f32 %v946, %v950
        %v952 = vpack.c.bf16 %v951, %v951
        %953 = vrot.lane.b32.xlu0 %v657, 96
        %v954 = vpop.permute.xlu0 %953
        %v956 = vsel %vm706, %v952, 0
        %v959 = vsel %vm722, %v954, 0
        %961 = vmatprep.subr.bf16.mxu0 0
        %962 = vmatpush1.bf16.msra.mxu0 %v959
        %963 = vmatprep.subr.bf16.mxu0 0
        %964 = vmatpush1.bf16.msra.mxu0 0
        %965 = vmatprep.subr.bf16.mxu0 0
        %966 = vmatpush1.bf16.msra.mxu0 0
        %967 = vmatprep.subr.bf16.mxu0 0
        %968 = vmatpush1.bf16.msra.mxu0 0
        %969 = vmatprep.subr.bf16.mxu0 0
        %970 = vmatpush1.bf16.msra.mxu0 0
        %971 = vmatprep.subr.bf16.mxu0 0
        %972 = vmatpush1.bf16.msra.mxu0 0
        %973 = vmatprep.subr.bf16.mxu0 0
        %974 = vmatpush1.bf16.msra.mxu0 0
        %975 = vmatprep.subr.bf16.mxu0 0
        %976 = vmatpush1.bf16.msra.mxu0 0
        %977 = vmatprep.subr.bf16.mxu0 0
        %978 = vmatpush1.bf16.msra.mxu0 0
        %979 = vmatprep.subr.bf16.mxu0 0
        %980 = vmatpush1.bf16.msra.mxu0 0
        %981 = vmatprep.subr.bf16.mxu0 0
        %982 = vmatpush1.bf16.msra.mxu0 0
        %983 = vmatprep.subr.bf16.mxu0 0
        %984 = vmatpush1.bf16.msra.mxu0 0
        %985 = vmatprep.subr.bf16.mxu0 0
        %986 = vmatpush1.bf16.msra.mxu0 0
        %987 = vmatprep.subr.bf16.mxu0 0
        %988 = vmatpush1.bf16.msra.mxu0 0
        %989 = vmatprep.subr.bf16.mxu0 0
        %990 = vmatpush1.bf16.msra.mxu0 0
        %991 = vmatprep.subr.bf16.mxu0 0
        %992 = vmatpush1.bf16.msra.mxu0 0
        %993 = vmatprep.mubr.bf16.mxu0 0
        %994 = vmatmul.mubr.bf16.gmra.mrb[0].mxu0 %v956
        %v995 = vpop.f32.mrb[0].mxu0
        %v996 = vadd.f32 0.0, %v995
        %v997 = vpop.f32.mrb[0].mxu0
        %v998 = vpop.f32.mrb[0].mxu0
        %v999 = vpop.f32.mrb[0].mxu0
        %1000 = vdwg.mxu0
        %1002 = vrot.lane.b32.xlu0 %v996, 32
        %v1003 = vpop.permute.xlu0 %1002
        %vm1005 = vcmask 392448
        %1006 = vst.msk [vmem:[%s389] sm:$0xff] %vm1005, %v1003
        %s1007 = scalar_lea.vmem %s396, 16 [#allocation12]
        %1008 = vst.msk [vmem:[%s1007] sm:$0xff] %vm706, %v951
        %1009 = vrot.lane.b32.xlu0 %v655, 80
        %v1010 = vpop.permute.xlu0 %1009
        %1011 = vrot.lane.b32.xlu0 %v656, 80
        %v1012 = vpop.permute.xlu0 %1011
        %v1014 = vsel %vm658, %v1010, 0
        %v1017 = vsel %vm658, %v1012, 0
        %1019 = vmatprep.subr.bf16.mxu0 0
        %1020 = vmatpush1.bf16.xpose.msra.mxu0 %v1017
        %1021 = vmatprep.subr.bf16.mxu0 0
        %1022 = vmatpush1.bf16.xpose.msra.mxu0 0
        %1023 = vmatprep.subr.bf16.mxu0 0
        %1024 = vmatpush1.bf16.xpose.msra.mxu0 0
        %1025 = vmatprep.subr.bf16.mxu0 0
        %1026 = vmatpush1.bf16.xpose.msra.mxu0 0
        %1027 = vmatprep.subr.bf16.mxu0 0
        %1028 = vmatpush1.bf16.xpose.msra.mxu0 0
        %1029 = vmatprep.subr.bf16.mxu0 0
        %1030 = vmatpush1.bf16.xpose.msra.mxu0 0
        %1031 = vmatprep.subr.bf16.mxu0 0
        %1032 = vmatpush1.bf16.xpose.msra.mxu0 0
        %1033 = vmatprep.subr.bf16.mxu0 0
        %1034 = vmatpush1.bf16.xpose.msra.mxu0 0
        %1035 = vmatprep.subr.bf16.mxu0 0
        %1036 = vmatpush1.bf16.xpose.msra.mxu0 0
        %1037 = vmatprep.subr.bf16.mxu0 0
        %1038 = vmatpush1.bf16.xpose.msra.mxu0 0
        %1039 = vmatprep.subr.bf16.mxu0 0
        %1040 = vmatpush1.bf16.xpose.msra.mxu0 0
        %1041 = vmatprep.subr.bf16.mxu0 0
        %1042 = vmatpush1.bf16.xpose.msra.mxu0 0
        %1043 = vmatprep.subr.bf16.mxu0 0
        %1044 = vmatpush1.bf16.xpose.msra.mxu0 0
        %1045 = vmatprep.subr.bf16.mxu0 0
        %1046 = vmatpush1.bf16.xpose.msra.mxu0 0
        %1047 = vmatprep.subr.bf16.mxu0 0
        %1048 = vmatpush1.bf16.xpose.msra.mxu0 0
        %1049 = vmatprep.subr.bf16.mxu0 0
        %1050 = vmatpush1.bf16.xpose.msra.mxu0 0
        %1051 = vmatprep.mubr.bf16.mxu0 0
        %1052 = vmatmul.mubr.bf16.gmra.mrb[0].mxu0 %v1014
        %v1053 = vpop.f32.mrb[0].mxu0
        %v1054 = vadd.f32 0.0, %v1053
        %v1055 = vpop.f32.mrb[0].mxu0
        %v1056 = vpop.f32.mrb[0].mxu0
        %v1057 = vpop.f32.mrb[0].mxu0
        %1058 = vdwg.mxu0
        %v1059 = vmul.f32 %v1054, 0.25
        %v1060 = vsel %vm706, %v1059, -inf
        %1061 = vmax.xlane.f32.xlu0 %v1060
        %v1062 = vpop.xlane.xlu0 %1061
        %v1063 = vsub.f32 %v1059, %v1062
        %v1064 = vmul.f32 %v1063, 1.442695
        %v1065 = vpow.pop %v1064
        %v1066 = vsel %vm706, %v1065, 0.0
        %1067 = vadd.xlane.f32.xlu0 %v1066
        %v1068 = vpop.xlane.xlu0 %1067
        %v1069 = vrcp.pop %v1068
        %v1070 = vmul.f32 %v1065, %v1069
        %v1071 = vpack.c.bf16 %v1070, %v1070
        %1072 = vrot.lane.b32.xlu0 %v657, 80
        %v1073 = vpop.permute.xlu0 %1072
        %v1075 = vsel %vm706, %v1071, 0
        %v1078 = vsel %vm722, %v1073, 0
        %1080 = vmatprep.subr.bf16.mxu0 0
        %1081 = vmatpush1.bf16.msra.mxu0 %v1078
        %1082 = vmatprep.subr.bf16.mxu0 0
        %1083 = vmatpush1.bf16.msra.mxu0 0
        %1084 = vmatprep.subr.bf16.mxu0 0
        %1085 = vmatpush1.bf16.msra.mxu0 0
        %1086 = vmatprep.subr.bf16.mxu0 0
        %1087 = vmatpush1.bf16.msra.mxu0 0
        %1088 = vmatprep.subr.bf16.mxu0 0
        %1089 = vmatpush1.bf16.msra.mxu0 0
        %1090 = vmatprep.subr.bf16.mxu0 0
        %1091 = vmatpush1.bf16.msra.mxu0 0
        %1092 = vmatprep.subr.bf16.mxu0 0
        %1093 = vmatpush1.bf16.msra.mxu0 0
        %1094 = vmatprep.subr.bf16.mxu0 0
        %1095 = vmatpush1.bf16.msra.mxu0 0
        %1096 = vmatprep.subr.bf16.mxu0 0
        %1097 = vmatpush1.bf16.msra.mxu0 0
        %1098 = vmatprep.subr.bf16.mxu0 0
        %1099 = vmatpush1.bf16.msra.mxu0 0
        %1100 = vmatprep.subr.bf16.mxu0 0
        %1101 = vmatpush1.bf16.msra.mxu0 0
        %1102 = vmatprep.subr.bf16.mxu0 0
        %1103 = vmatpush1.bf16.msra.mxu0 0
        %1104 = vmatprep.subr.bf16.mxu0 0
        %1105 = vmatpush1.bf16.msra.mxu0 0
        %1106 = vmatprep.subr.bf16.mxu0 0
        %1107 = vmatpush1.bf16.msra.mxu0 0
        %1108 = vmatprep.subr.bf16.mxu0 0
        %1109 = vmatpush1.bf16.msra.mxu0 0
        %1110 = vmatprep.subr.bf16.mxu0 0
        %1111 = vmatpush1.bf16.msra.mxu0 0
        %1112 = vmatprep.mubr.bf16.mxu0 0
        %1113 = vmatmul.mubr.bf16.gmra.mrb[0].mxu0 %v1075
        %v1114 = vpop.f32.mrb[0].mxu0
        %v1115 = vadd.f32 0.0, %v1114
        %v1116 = vpop.f32.mrb[0].mxu0
        %v1117 = vpop.f32.mrb[0].mxu0
        %v1118 = vpop.f32.mrb[0].mxu0
        %1119 = vdwg.mxu0
        %1121 = vrot.lane.b32.xlu0 %v1115, 48
        %v1122 = vpop.permute.xlu0 %1121
        %vm1124 = vcmask 523648
        %1125 = vst.msk [vmem:[%s389] sm:$0xff] %vm1124, %v1122
        %s1126 = scalar_lea.vmem %s396, 24 [#allocation12]
        %1127 = vst.msk [vmem:[%s1126] sm:$0xff] %vm706, %v1070
        %s1128 = sand.u32 %s175, 1
        %s1129 = scalar_lea.sflag [#allocation4], %s1128
        %s1130 = sand.u32 %s175, 1
        %s1131 = smul.addr %s1130, 8
        %s1132 = scalar_lea.vmem [#allocation11], %s1131
        %s1133 = sand.u32 %s203, 1
        %s1134 = scalar_lea.sflag [#allocation13], %s1133
        %s1135 = sand.u32 %s203, 1
        %s1136 = smul.addr %s1135, 32
        %s1137 = scalar_lea.vmem [#allocation12], %s1136
        // Predicated region
        $region61: #{multi_head_attention_forward.1} parent=39 // pred_check
          %p1138 = pneg %p185
        $region62: #{multi_head_attention_forward.1} parent=39 // pred_check_branch
          %1140 = sbr.rel (%p1138) target = $region64
        $region63: #{multi_head_attention_forward.1} parent=39 // pred_region
          %s1142 = ssub.s32 128, 128
          %1143 = vsyncadd %s1129, %s1142
          %s1144 = sadd.s32 %s36, %s35
          %s1145 = smul.addr %s1144, 128
          %s1146 = scalar_lea.hbm %s5, %s1145
          %s1148 = sshll.u32 %s1132, 4
          %s1149 = int_to_ptr.vmem [resolvable:$true] %s1148
          %1151 = dma.vmem_to_hbm [thread:$0]  %s1149, 128, %s1146, %s1129
        $region64: #{multi_head_attention_forward.1} parent=39 // pred_fallthru
          _
        // Predicated region
        $region65: #{multi_head_attention_forward.1} parent=39 // pred_check
          %p1152 = pneg %p213
        $region66: #{multi_head_attention_forward.1} parent=39 // pred_check_branch
          %1154 = sbr.rel (%p1152) target = $region68
        $region67: #{multi_head_attention_forward.1} parent=39 // pred_region
          %s1156 = ssub.s32 512, 512
          %1157 = vsyncadd %s1134, %s1156
          %s1158 = sadd.s32 %s36, %s35
          %s1159 = smul.addr %s1158, 128
          %s1160 = scalar_lea.hbm %s6, %s1159
          %s1161 = sshll.u32 %s1137, 4
          %s1162 = int_to_ptr.vmem [resolvable:$true] %s1161
          %1167 = dma.vmem_to_hbm [thread:$0]  %s1162, 512, %s1160, %s1134, 128, 256, 8
        $region68: #{multi_head_attention_forward.1} parent=39 // pred_fallthru
          _
      $region40: #{multi_head_attention_forward.1} parent=5 // pred_fallthru
        _
      %p1168 = scmp.le.s32.totalorder 2, %s26
      // Predicated region
      $region69: #{multi_head_attention_forward.1} parent=5 // pred_check
        %p1169 = pneg %p1168
      $region70: #{multi_head_attention_forward.1} parent=5 // pred_check_branch
        %1171 = sbr.rel (%p1169) target = $region72
      $region71: #{multi_head_attention_forward.1} parent=5 // pred_region
        %s1172 = ssub.s32 %s26, 2
        // Predicated region
        $region73: #{multi_head_attention_forward.1} parent=71 // pred_check
          %p1173 = pneg %p191
        $region74: #{multi_head_attention_forward.1} parent=71 // pred_check_branch
          %1175 = sbr.rel (%p1173) target = $region76
        $region75: #{multi_head_attention_forward.1} parent=71 // pred_region
          %s1176 = sand.u32 %s176, 1
          %s1177 = scalar_lea.sflag [#allocation4], %s1176
          %s1178 = sand.u32 %s176, 1
          %s1179 = smul.addr %s1178, 8
          %s1180 = scalar_lea.vmem [#allocation11], %s1179
          %1181 = dma.done %s1177, 128
        $region76: #{multi_head_attention_forward.1} parent=71 // pred_fallthru
          _
        // Predicated region
        $region77: #{multi_head_attention_forward.1} parent=71 // pred_check
          %p1182 = pneg %p219
        $region78: #{multi_head_attention_forward.1} parent=71 // pred_check_branch
          %1184 = sbr.rel (%p1182) target = $region80
        $region79: #{multi_head_attention_forward.1} parent=71 // pred_region
          %s1185 = sand.u32 %s204, 1
          %s1186 = scalar_lea.sflag [#allocation13], %s1185
          %s1187 = sand.u32 %s204, 1
          %s1188 = smul.addr %s1187, 32
          %s1189 = scalar_lea.vmem [#allocation12], %s1188
          %1190 = dma.done %s1186, 512
        $region80: #{multi_head_attention_forward.1} parent=71 // pred_fallthru
          _
      $region72: #{multi_head_attention_forward.1} parent=5 // pred_fallthru
        _
    $region6: #{multi_head_attention_forward.1} parent=1 // loop_footer
      %s30 = sadd.s32 1, %s26
    $region7: #{multi_head_attention_forward.1} parent=1 // loop_footer_branch
      %25 = sbr.rel target = $region3
    $region8: #{multi_head_attention_forward.1} parent=1 // loop_exit
      _
    %1191 = vsyncpa [#allocation3], 1
    %s1192 = scalar_lea.sflag [#allocation3], 1
    %1193 = vsyncpa %s1192, 1
    %1194 = vsyncpa [#allocation6], 1
    %s1195 = scalar_lea.sflag [#allocation6], 1
    %1196 = vsyncpa %s1195, 1
    %1197 = vsyncpa [#allocation9], 1
    %1198 = vsyncpa [#allocation4], 1
    %s1199 = scalar_lea.sflag [#allocation4], 1
    %1200 = vsyncpa %s1199, 1
    %1201 = vsyncpa [#allocation13], 1
    %s1202 = scalar_lea.sflag [#allocation13], 1
    %1203 = vsyncpa %s1202, 1

</llo_original>
